<compile_context>
chip_gen: v7x
topology: tpu7x:2x2x1
jax: 0.10.0
libtpu: 0.0.40
codegen_flags: <defaults>
</compile_context>

<pallas_src>
import jax
import jax.numpy as jnp
from jax.experimental import pallas as pl
from jax.experimental.pallas import tpu as pltpu


def _round_up(x, m):
    return (x + m - 1) // m * m


# --------------------------- Fused forward kernel ---------------------------
def fused_ugp_kernel(gsnp_ref, nodew_ref, readout_ref,
                     w1_ref, b1_ref, w2_ref, b2_ref, w3_ref, b3_ref,
                     out_ref, acc_ref):
    # gsnp_ref:    (batch_pad, node_tile)   snp values gathered per node (whole batch)
    # nodew_ref:   (1, node_tile)           mean-over-filters weight per node
    # readout_ref: (node_tile, genes_pad)   one-hot node->gene readout tile
    # w*/b*:       predictor MLP params (resident, same block every step)
    # out_ref:     (batch_pad, 1)
    # acc_ref:     (batch_pad, genes_pad)   persistent f32 sample_h accumulator
    k = pl.program_id(0)

    @pl.when(k == 0)
    def _init():
        acc_ref[...] = jnp.zeros_like(acc_ref)

    # Per-node weighting (VPU) then graph readout as one MXU matmul for the whole batch.
    weighted = gsnp_ref[...] * nodew_ref[...]                      # (batch_pad, node_tile)
    acc_ref[...] += jnp.dot(weighted, readout_ref[...],
                            preferred_element_type=jnp.float32)    # (batch_pad, genes_pad)

    @pl.when(k == pl.num_programs(0) - 1)
    def _finalize():
        sample_h = acc_ref[...]                                    # (batch_pad, genes_pad)
        h = jnp.dot(sample_h, w1_ref[...],
                    preferred_element_type=jnp.float32) + b1_ref[...]
        h = jnp.maximum(h, 0.0)
        h = jnp.dot(h, w2_ref[...],
                    preferred_element_type=jnp.float32) + b2_ref[...]
        h = jnp.maximum(h, 0.0)
        # Final 256 -> 1 as a VPU multiply + cross-lane reduce (no lane-sparse matmul).
        out_ref[...] = jnp.sum(h * w3_ref[...], axis=-1, keepdims=True) + b3_ref[...]


def ugp_v1_forward(snp, snp_ids, node2gene, params, n_genes, *, node_tile=512):
    # snp: (batch, n_snps) f32; snp_ids: (n_nodes,) i32; node2gene: (n_nodes,) i32
    filters = params["filters"]                                    # (n_filters, n_snps)
    batch = snp.shape[0]
    n_nodes = snp_ids.shape[0]
    d1 = params["w1"].shape[1]                                     # 1024
    d2 = params["w2"].shape[1]                                     # 256

    # Linearity rewrite: mean over filters first (exact for the forward pass).
    mean_filt = jnp.mean(filters, axis=0)                          # (n_snps,)

    # Cheap O(n_nodes) glue: gathers + one-hot readout construction.
    gathered_snp = jnp.take(snp, snp_ids, axis=1)                  # (batch, n_nodes)
    node_weight = jnp.take(mean_filt, snp_ids, axis=0)             # (n_nodes,)
    readout = jax.nn.one_hot(node2gene, n_genes, dtype=jnp.float32)  # (n_nodes, n_genes)

    # Zero-pad everything to (8, 128)-aligned, lane-dense shapes.  Padded nodes
    # carry zero weight and zero readout rows; padded gene columns map to zero
    # rows of w1, so the result is exact.
    batch_pad = _round_up(batch, 8)
    node_tile = min(node_tile, _round_up(n_nodes, 128))
    nodes_pad = _round_up(n_nodes, node_tile)
    genes_pad = _round_up(n_genes, 128)

    gsnp_p = jnp.zeros((batch_pad, nodes_pad), jnp.float32
                       ).at[:batch, :n_nodes].set(gathered_snp)
    nodew_p = jnp.zeros((1, nodes_pad), jnp.float32
                        ).at[0, :n_nodes].set(node_weight)
    readout_p = jnp.zeros((nodes_pad, genes_pad), jnp.float32
                          ).at[:n_nodes, :n_genes].set(readout)
    w1_p = jnp.zeros((genes_pad, d1), jnp.float32).at[:n_genes, :].set(params["w1"])
    w3_row = params["w3"].T                                        # (1, 256)

    grid = (nodes_pad // node_tile,)
    out = pl.pallas_call(
        fused_ugp_kernel,
        out_shape=jax.ShapeDtypeStruct((batch_pad, 1), jnp.float32),
        grid=grid,
        in_specs=[
            pl.BlockSpec((batch_pad, node_tile), lambda k: (0, k)),
            pl.BlockSpec((1, node_tile), lambda k: (0, k)),
            pl.BlockSpec((node_tile, genes_pad), lambda k: (k, 0)),
            pl.BlockSpec((genes_pad, d1), lambda k: (0, 0)),
            pl.BlockSpec((1, d1), lambda k: (0, 0)),
            pl.BlockSpec((d1, d2), lambda k: (0, 0)),
            pl.BlockSpec((1, d2), lambda k: (0, 0)),
            pl.BlockSpec((1, d2), lambda k: (0, 0)),
            pl.BlockSpec((1, 1), lambda k: (0, 0)),
        ],
        out_specs=pl.BlockSpec((batch_pad, 1), lambda k: (0, 0)),
        scratch_shapes=[pltpu.VMEM((batch_pad, genes_pad), jnp.float32)],
        compiler_params=pltpu.CompilerParams(
            dimension_semantics=("arbitrary",),          # node axis is a reduction
            vmem_limit_bytes=48 * 1024 * 1024,           # safe on v5e/v6e (128 MiB) & v7x (64 MiB)
        ),
    )(gsnp_p, nodew_p, readout_p,
      w1_p, params["b1"], params["w2"], params["b2"], w3_row, params["b3"])

    preds = out[:batch]                                            # (batch, 1)
    return preds, filters


# ----------------------------- Pure-JAX reference ---------------------------
def ugp_v1_reference(snp, snp_ids, node2gene, params, n_genes):
    filters = params["filters"]
    snp_h = snp[:, :, None] * filters.T[None, :, :]                # (batch, n_snps, n_filters)
    h = snp_h[:, snp_ids, :]                                       # (batch, n_nodes, n_filters)
    M = jax.nn.one_hot(node2gene, n_genes, dtype=jnp.float32)
    gene_sum = jnp.einsum("bnf,ng->bgf", h, M)                     # (batch, n_genes, n_filters)
    sample_h = jnp.mean(gene_sum, axis=-1)                         # (batch, n_genes)
    h1 = jax.nn.relu(sample_h @ params["w1"] + params["b1"])
    h2 = jax.nn.relu(h1 @ params["w2"] + params["b2"])
    preds = h2 @ params["w3"] + params["b3"]
    return preds, filters


# ----------------------------- Main ----------------------------------------
if __name__ == "__main__":
    batch = 2
    n_snps = 64
    n_genes = 32
    n_nodes = 96        # total nodes in the batched gene graph
    n_filters = 8
    d_emb = 8           # snp_emb exists in __init__ but is unused in forward()

    key = jax.random.PRNGKey(0)
    k_filt, k_w1, k_w2, k_w3, k_emb, k_snp, k_ids, k_gene = jax.random.split(key, 8)

    # Deterministic parameter init (mirrors __init__ / bert_init_params):
    params = {
        # nn.Parameter(torch.randn(n_snps) * 0.001) for each filter, stacked
        "filters": jax.random.normal(k_filt, (n_filters, n_snps), jnp.float32) * 0.001,
        # nn.Linear weights ~ N(0, 0.02), biases = 0 (stored transposed: (in, out))
        "w1": jax.random.normal(k_w1, (n_genes, 1024), jnp.float32) * 0.02,
        "b1": jnp.zeros((1, 1024), jnp.float32),
        "w2": jax.random.normal(k_w2, (1024, 256), jnp.float32) * 0.02,
        "b2": jnp.zeros((1, 256), jnp.float32),
        "w3": jax.random.normal(k_w3, (256, 1), jnp.float32) * 0.02,
        "b3": jnp.zeros((1, 1), jnp.float32),
        # unused in forward(); kept for shape fidelity
        "snp_emb": jax.random.normal(k_emb, (10, d_emb), jnp.float32) * 0.02,
    }

    # Inputs: genotype-like values, node->snp ids, node->gene membership (graph)
    snp = jax.random.randint(k_snp, (batch, n_snps), 0, 3).astype(jnp.float32)
    snp_ids = jax.random.randint(k_ids, (n_nodes,), 0, n_snps, dtype=jnp.int32)
    node2gene = jax.random.randint(k_gene, (n_nodes,), 0, n_genes, dtype=jnp.int32)

    fwd = jax.jit(ugp_v1_forward, static_argnames=("n_genes", "node_tile"))
    preds, filt_stack = fwd(snp, snp_ids, node2gene, params, n_genes=n_genes)
    preds = jax.block_until_ready(preds)
    filt_stack = jax.block_until_ready(filt_stack)

    ref_preds, ref_filt = ugp_v1_reference(snp, snp_ids, node2gene, params, n_genes)
    assert preds.shape == (batch, 1)
    assert filt_stack.shape == (n_filters, n_snps)
    assert jnp.allclose(preds, ref_preds, rtol=1e-4, atol=1e-5)
    assert jnp.allclose(filt_stack, ref_filt)

    print("KERNEL_OK")
</pallas_src>

<mosaic_0001>
module attributes {stable_mosaic.version = 11 : i64} {
  func.func @fused_ugp_kernel(%arg0: i32, %arg1: memref<8x128xf32, #tpu.memory_space<vmem>>, %arg2: memref<1x128xf32, #tpu.memory_space<vmem>>, %arg3: memref<128x128xf32, #tpu.memory_space<vmem>>, %arg4: memref<128x1024xf32, #tpu.memory_space<vmem>>, %arg5: memref<1x1024xf32, #tpu.memory_space<vmem>>, %arg6: memref<1024x256xf32, #tpu.memory_space<vmem>>, %arg7: memref<1x256xf32, #tpu.memory_space<vmem>>, %arg8: memref<1x256xf32, #tpu.memory_space<vmem>>, %arg9: memref<1x1xf32, #tpu.memory_space<vmem>>, %arg10: memref<8x1xf32, #tpu.memory_space<vmem>>, %arg11: memref<8x128xf32, #tpu.memory_space<vmem>>) attributes {dimension_semantics = [#tpu.dimension_semantics<arbitrary>], iteration_bounds = array<i64: 1>, scalar_prefetch = 0 : i64, scratch_operands = 1 : i64, tpu.core_type = #tpu.core_type<tc>, window_params = [{transform_indices = @transform_0, window_bounds = array<i64: 8, 128>}, {transform_indices = @transform_1, window_bounds = array<i64: 1, 128>}, {transform_indices = @transform_2, window_bounds = array<i64: 128, 128>}, {pipeline_mode = #tpu.pipeline_mode<synchronous>, transform_indices = @transform_3, window_bounds = array<i64: 128, 1024>}, {pipeline_mode = #tpu.pipeline_mode<synchronous>, transform_indices = @transform_4, window_bounds = array<i64: 1, 1024>}, {pipeline_mode = #tpu.pipeline_mode<synchronous>, transform_indices = @transform_5, window_bounds = array<i64: 1024, 256>}, {pipeline_mode = #tpu.pipeline_mode<synchronous>, transform_indices = @transform_6, window_bounds = array<i64: 1, 256>}, {pipeline_mode = #tpu.pipeline_mode<synchronous>, transform_indices = @transform_7, window_bounds = array<i64: 1, 256>}, {pipeline_mode = #tpu.pipeline_mode<synchronous>, transform_indices = @transform_8, window_bounds = array<i64: 1, 1>}, {pipeline_mode = #tpu.pipeline_mode<synchronous>, transform_indices = @transform_9, window_bounds = array<i64: 8, 1>}]} {
    %c0_i32 = arith.constant 0 : i32
    %0 = arith.cmpi eq, %arg0, %c0_i32 : i32
    %1 = arith.extui %0 : i1 to i32
    %c0_i32_0 = arith.constant 0 : i32
    %2 = arith.cmpi ne, %1, %c0_i32_0 : i32
    scf.if %2 {
      %cst_12 = arith.constant 0.000000e+00 : f32
      %15 = vector.broadcast %cst_12 : f32 to vector<8x128xf32>
      %c0_13 = arith.constant 0 : index
      %c0_14 = arith.constant 0 : index
      %16 = vector.load %arg11[%c0_13, %c0_14] : memref<8x128xf32, #tpu.memory_space<vmem>>, vector<8x128xf32>
      tpu.vector_store %arg11[%c0_13, %c0_14], %15 {strides = array<i32>} : memref<8x128xf32, #tpu.memory_space<vmem>>, vector<8x128xf32>,
    } else {
    }
    %c0 = arith.constant 0 : index
    %c0_1 = arith.constant 0 : index
    %3 = vector.load %arg1[%c0, %c0_1] : memref<8x128xf32, #tpu.memory_space<vmem>>, vector<8x128xf32>
    %c0_2 = arith.constant 0 : index
    %c0_3 = arith.constant 0 : index
    %4 = vector.load %arg2[%c0_2, %c0_3] : memref<1x128xf32, #tpu.memory_space<vmem>>, vector<1x128xf32>
    %5 = vector.broadcast %4 : vector<1x128xf32> to vector<8x128xf32>
    %6 = arith.mulf %3, %5 : vector<8x128xf32>
    %c0_4 = arith.constant 0 : index
    %c0_5 = arith.constant 0 : index
    %7 = vector.load %arg11[%c0_4, %c0_5] : memref<8x128xf32, #tpu.memory_space<vmem>>, vector<8x128xf32>
    %c0_6 = arith.constant 0 : index
    %c0_7 = arith.constant 0 : index
    %8 = vector.load %arg3[%c0_6, %c0_7] : memref<128x128xf32, #tpu.memory_space<vmem>>, vector<128x128xf32>
    %cst = arith.constant dense<0.000000e+00> : vector<8x128xf32>
    %9 = tpu.matmul %6, %8, %cst {dimension_numbers = #tpu.dot_dimension_numbers<[1], [0], [0], [1], [0, 0, 1, 1], [], []>} : vector<8x128xf32>, vector<128x128xf32>, vector<8x128xf32> -> vector<8x128xf32>
    %10 = arith.addf %7, %9 : vector<8x128xf32>
    %c0_8 = arith.constant 0 : index
    %c0_9 = arith.constant 0 : index
    %11 = vector.load %arg11[%c0_8, %c0_9] : memref<8x128xf32, #tpu.memory_space<vmem>>, vector<8x128xf32>
    tpu.vector_store %arg11[%c0_8, %c0_9], %10 {strides = array<i32>} : memref<8x128xf32, #tpu.memory_space<vmem>>, vector<8x128xf32>,
    %c0_i32_10 = arith.constant 0 : i32
    %12 = arith.cmpi eq, %arg0, %c0_i32_10 : i32
    %13 = arith.extui %12 : i1 to i32
    %c0_i32_11 = arith.constant 0 : i32
    %14 = arith.cmpi ne, %13, %c0_i32_11 : i32
    scf.if %14 {
      %c0_12 = arith.constant 0 : index
      %c0_13 = arith.constant 0 : index
      %15 = vector.load %arg11[%c0_12, %c0_13] : memref<8x128xf32, #tpu.memory_space<vmem>>, vector<8x128xf32>
      %c0_14 = arith.constant 0 : index
      %c0_15 = arith.constant 0 : index
      %16 = vector.load %arg4[%c0_14, %c0_15] : memref<128x1024xf32, #tpu.memory_space<vmem>>, vector<128x1024xf32>
      %cst_16 = arith.constant dense<0.000000e+00> : vector<8x1024xf32>
      %17 = tpu.matmul %15, %16, %cst_16 {dimension_numbers = #tpu.dot_dimension_numbers<[1], [0], [0], [1], [0, 0, 1, 1], [], []>} : vector<8x128xf32>, vector<128x1024xf32>, vector<8x1024xf32> -> vector<8x1024xf32>
      %c0_17 = arith.constant 0 : index
      %c0_18 = arith.constant 0 : index
      %18 = vector.load %arg5[%c0_17, %c0_18] : memref<1x1024xf32, #tpu.memory_space<vmem>>, vector<1x1024xf32>
      %19 = vector.broadcast %18 : vector<1x1024xf32> to vector<8x1024xf32>
      %20 = arith.addf %17, %19 : vector<8x1024xf32>
      %cst_19 = arith.constant 0.000000e+00 : f32
      %21 = vector.broadcast %cst_19 : f32 to vector<8x1024xf32>
      %22 = arith.maximumf %20, %21 : vector<8x1024xf32>
      %c0_20 = arith.constant 0 : index
      %c0_21 = arith.constant 0 : index
      %23 = vector.load %arg6[%c0_20, %c0_21] : memref<1024x256xf32, #tpu.memory_space<vmem>>, vector<1024x256xf32>
      %cst_22 = arith.constant dense<0.000000e+00> : vector<8x256xf32>
      %24 = tpu.matmul %22, %23, %cst_22 {dimension_numbers = #tpu.dot_dimension_numbers<[1], [0], [0], [1], [0, 0, 1, 1], [], []>} : vector<8x1024xf32>, vector<1024x256xf32>, vector<8x256xf32> -> vector<8x256xf32>
      %c0_23 = arith.constant 0 : index
      %c0_24 = arith.constant 0 : index
      %25 = vector.load %arg7[%c0_23, %c0_24] : memref<1x256xf32, #tpu.memory_space<vmem>>, vector<1x256xf32>
      %26 = vector.broadcast %25 : vector<1x256xf32> to vector<8x256xf32>
      %27 = arith.addf %24, %26 : vector<8x256xf32>
      %cst_25 = arith.constant 0.000000e+00 : f32
      %28 = vector.broadcast %cst_25 : f32 to vector<8x256xf32>
      %29 = arith.maximumf %27, %28 : vector<8x256xf32>
      %c0_26 = arith.constant 0 : index
      %c0_27 = arith.constant 0 : index
      %30 = vector.load %arg8[%c0_26, %c0_27] : memref<1x256xf32, #tpu.memory_space<vmem>>, vector<1x256xf32>
      %31 = vector.broadcast %30 : vector<1x256xf32> to vector<8x256xf32>
      %32 = arith.mulf %29, %31 : vector<8x256xf32>
      %cst_28 = arith.constant dense<0.000000e+00> : vector<8xf32>
      %33 = vector.multi_reduction <add>, %32, %cst_28 [1] : vector<8x256xf32> to vector<8xf32>
      %34 = vector.shape_cast %33 : vector<8xf32> to vector<8x1xf32>
      %c0_29 = arith.constant 0 : index
      %c0_30 = arith.constant 0 : index
      %35 = vector.load %arg9[%c0_29, %c0_30] : memref<1x1xf32, #tpu.memory_space<vmem>>, vector<1x1xf32>
      %36 = vector.broadcast %35 : vector<1x1xf32> to vector<8x1xf32>
      %37 = arith.addf %34, %36 : vector<8x1xf32>
      %c0_31 = arith.constant 0 : index
      %c0_32 = arith.constant 0 : index
      %38 = vector.load %arg10[%c0_31, %c0_32] : memref<8x1xf32, #tpu.memory_space<vmem>>, vector<8x1xf32>
      tpu.vector_store %arg10[%c0_31, %c0_32], %37 {strides = array<i32>} : memref<8x1xf32, #tpu.memory_space<vmem>>, vector<8x1xf32>,
    } else {
    }
    return
  }
  func.func @transform_0(%arg0: i32) -> (i32, i32) {
    %c0_i32 = arith.constant 0 : i32
    %c0_i32_0 = arith.constant 0 : i32
    return %c0_i32, %arg0 : i32, i32
  }
  func.func @transform_1(%arg0: i32) -> (i32, i32) {
    %c0_i32 = arith.constant 0 : i32
    %c0_i32_0 = arith.constant 0 : i32
    return %c0_i32, %arg0 : i32, i32
  }
  func.func @transform_2(%arg0: i32) -> (i32, i32) {
    %c0_i32 = arith.constant 0 : i32
    %c0_i32_0 = arith.constant 0 : i32
    return %arg0, %c0_i32 : i32, i32
  }
  func.func @transform_3(%arg0: i32) -> (i32, i32) {
    %c0_i32 = arith.constant 0 : i32
    %c0_i32_0 = arith.constant 0 : i32
    %c0_i32_1 = arith.constant 0 : i32
    return %c0_i32, %c0_i32_0 : i32, i32
  }
  func.func @transform_4(%arg0: i32) -> (i32, i32) {
    %c0_i32 = arith.constant 0 : i32
    %c0_i32_0 = arith.constant 0 : i32
    %c0_i32_1 = arith.constant 0 : i32
    return %c0_i32, %c0_i32_0 : i32, i32
  }
  func.func @transform_5(%arg0: i32) -> (i32, i32) {
    %c0_i32 = arith.constant 0 : i32
    %c0_i32_0 = arith.constant 0 : i32
    %c0_i32_1 = arith.constant 0 : i32
    return %c0_i32, %c0_i32_0 : i32, i32
  }
  func.func @transform_6(%arg0: i32) -> (i32, i32) {
    %c0_i32 = arith.constant 0 : i32
    %c0_i32_0 = arith.constant 0 : i32
    %c0_i32_1 = arith.constant 0 : i32
    return %c0_i32, %c0_i32_0 : i32, i32
  }
  func.func @transform_7(%arg0: i32) -> (i32, i32) {
    %c0_i32 = arith.constant 0 : i32
    %c0_i32_0 = arith.constant 0 : i32
    %c0_i32_1 = arith.constant 0 : i32
    return %c0_i32, %c0_i32_0 : i32, i32
  }
  func.func @transform_8(%arg0: i32) -> (i32, i32) {
    %c0_i32 = arith.constant 0 : i32
    %c0_i32_0 = arith.constant 0 : i32
    %c0_i32_1 = arith.constant 0 : i32
    return %c0_i32, %c0_i32_0 : i32, i32
  }
  func.func @transform_9(%arg0: i32) -> (i32, i32) {
    %c0_i32 = arith.constant 0 : i32
    %c0_i32_0 = arith.constant 0 : i32
    %c0_i32_1 = arith.constant 0 : i32
    return %c0_i32, %c0_i32_0 : i32, i32
  }
}

</mosaic_0001>

<llo_original>
// kernel: ugp_v1_forward.1
$region0: #{ugp_v1_forward.1}
  #allocation0 [shape = 'u32[]', space=smem, size = 0x4, offset = 0x4, fixed_abs, tag = 'smem constant byte address 0x4 - core index']
  #allocation1 [shape = 'u32[144,128]{1,0:T(1,128)}', space=vmem, size = 0x12000, scoped, tag = 'internal scratch']
  #allocation2 [shape = 'f32[8,128]{1,0:T(8,128)}', space=vmem, size = 0x1000, scoped, tag = 'scratch operand']
  #allocation3 [shape = 'f32[1,1]{1,0:T(1,128)S(1)}', space=vmem, size = 0x200, scoped, tag = 'scoped memory for ugp_v1_forward.1']
  %s0 = inlined_call_operand.vmem [shape: f32[8,128], index: 0, kind: input, shape index: {}]
  %s1 = inlined_call_operand.vmem [shape: f32[1,128], index: 1, kind: input, shape index: {}]
  %s2 = inlined_call_operand.vmem [shape: f32[128,128], index: 2, kind: input, shape index: {}]
  %s3 = inlined_call_operand.vmem [shape: f32[128,1024], index: 3, kind: input, shape index: {}]
  %s4 = inlined_call_operand.vmem [shape: f32[1,1024], index: 4, kind: input, shape index: {}]
  %s5 = inlined_call_operand.vmem [shape: f32[1024,256], index: 5, kind: input, shape index: {}]
  %s6 = inlined_call_operand.vmem [shape: f32[1,256], index: 6, kind: input, shape index: {}]
  %s7 = inlined_call_operand.vmem [shape: f32[1,256], index: 7, kind: input, shape index: {}]
  %s8 = inlined_call_operand.<no memory space> [shape: f32[1,1], index: 8, kind: input, shape index: {}]
  %s9 = inlined_call_operand.vmem [shape: f32[8,1], index: 9, kind: output, shape index: {}]
  %s10 = sld [smem:[#allocation0]]
  $region54: #{ugp_v1_forward.1} parent=0
    _
  %s12 = ssub.s32 1, %s10
  %s13 = scalar_select 0, %s12, %s10
  %v14 = vstv %s8
  %15 = vst [vmem:[#allocation3] sm:$0x1] %v14
  // Predicated region
  $region2: #{ugp_v1_forward.1} parent=0 // pred_check
    _
  $region3: #{ugp_v1_forward.1} parent=0 // pred_check_branch
    %17 = sbr.rel (0) target = $region5
  $region4: #{ugp_v1_forward.1} parent=0 // pred_region
    _
  $region5: #{ugp_v1_forward.1} parent=0 // pred_fallthru
    _
  // Predicated region
  $region6: #{ugp_v1_forward.1} parent=0 // pred_check
    _
  $region7: #{ugp_v1_forward.1} parent=0 // pred_check_branch
    %19 = sbr.rel (0) target = $region9
  $region8: #{ugp_v1_forward.1} parent=0 // pred_region
    _
  $region9: #{ugp_v1_forward.1} parent=0 // pred_fallthru
    _
  // Predicated region
  $region10: #{ugp_v1_forward.1} parent=0 // pred_check
    _
  $region11: #{ugp_v1_forward.1} parent=0 // pred_check_branch
    %21 = sbr.rel (0) target = $region13
  $region12: #{ugp_v1_forward.1} parent=0 // pred_region
    _
  $region13: #{ugp_v1_forward.1} parent=0 // pred_fallthru
    _
  // Predicated region
  $region14: #{ugp_v1_forward.1} parent=0 // pred_check
    _
  $region15: #{ugp_v1_forward.1} parent=0 // pred_check_branch
    %23 = sbr.rel (0) target = $region17
  $region16: #{ugp_v1_forward.1} parent=0 // pred_region
    _
  $region17: #{ugp_v1_forward.1} parent=0 // pred_fallthru
    _
  // Predicated region
  $region18: #{ugp_v1_forward.1} parent=0 // pred_check
    _
  $region19: #{ugp_v1_forward.1} parent=0 // pred_check_branch
    %25 = sbr.rel (0) target = $region21
  $region20: #{ugp_v1_forward.1} parent=0 // pred_region
    _
  $region21: #{ugp_v1_forward.1} parent=0 // pred_fallthru
    _
  // Predicated region
  $region22: #{ugp_v1_forward.1} parent=0 // pred_check
    _
  $region23: #{ugp_v1_forward.1} parent=0 // pred_check_branch
    %27 = sbr.rel (0) target = $region25
  $region24: #{ugp_v1_forward.1} parent=0 // pred_region
    _
  $region25: #{ugp_v1_forward.1} parent=0 // pred_fallthru
    _
  // Predicated region
  $region26: #{ugp_v1_forward.1} parent=0 // pred_check
    _
  $region27: #{ugp_v1_forward.1} parent=0 // pred_check_branch
    %29 = sbr.rel (0) target = $region29
  $region28: #{ugp_v1_forward.1} parent=0 // pred_region
    _
  $region29: #{ugp_v1_forward.1} parent=0 // pred_fallthru
    _
  // Predicated region
  $region30: #{ugp_v1_forward.1} parent=0 // pred_check
    _
  $region31: #{ugp_v1_forward.1} parent=0 // pred_check_branch
    %31 = sbr.rel (0) target = $region33
  $region32: #{ugp_v1_forward.1} parent=0 // pred_region
    _
  $region33: #{ugp_v1_forward.1} parent=0 // pred_fallthru
    _
  // Predicated region
  $region34: #{ugp_v1_forward.1} parent=0 // pred_check
    _
  $region35: #{ugp_v1_forward.1} parent=0 // pred_check_branch
    %33 = sbr.rel (0) target = $region37
  $region36: #{ugp_v1_forward.1} parent=0 // pred_region
    _
  $region37: #{ugp_v1_forward.1} parent=0 // pred_fallthru
    _
  %p34 = scmp.eq.s32.totalorder 0, 0
  // Predicated region
  $region38: #{ugp_v1_forward.1} parent=0 // pred_check
    %p35 = pneg %p34
  $region39: #{ugp_v1_forward.1} parent=0 // pred_check_branch
    %37 = sbr.rel (%p35) target = $region41
  $region40: #{ugp_v1_forward.1} parent=0 // pred_region
    %38 = vst [vmem:[#allocation2] sm:$0xff] 0.0
  $region41: #{ugp_v1_forward.1} parent=0 // pred_fallthru
    _
  %v39 = vld [vmem:[%s0] sm:$0xff]
  %v40 = vld [vmem:[%s1] sm:$0x1]
  %v42 = vlaneseq
  %v43 = vshrl.u32 %v42, 7
  %v44 = vsub.s32 0, %v43
  %v45 = vrot.slane %v40, %v44
  %v47 = vmul.f32 %v39, %v45
  %v48 = vld [vmem:[#allocation2] sm:$0xff]
  %v49 = vld [vmem:[%s2] sm:$0xff]
  %v50 = vld [vmem:[%s2 + $0x8] sm:$0xff]
  %v51 = vld [vmem:[%s2 + $0x10] sm:$0xff]
  %v52 = vld [vmem:[%s2 + $0x18] sm:$0xff]
  %v53 = vld [vmem:[%s2 + $0x20] sm:$0xff]
  %v54 = vld [vmem:[%s2 + $0x28] sm:$0xff]
  %v55 = vld [vmem:[%s2 + $0x30] sm:$0xff]
  %v56 = vld [vmem:[%s2 + $0x38] sm:$0xff]
  %v57 = vld [vmem:[%s2 + $0x40] sm:$0xff]
  %v58 = vld [vmem:[%s2 + $0x48] sm:$0xff]
  %v59 = vld [vmem:[%s2 + $0x50] sm:$0xff]
  %v60 = vld [vmem:[%s2 + $0x58] sm:$0xff]
  %v61 = vld [vmem:[%s2 + $0x60] sm:$0xff]
  %v62 = vld [vmem:[%s2 + $0x68] sm:$0xff]
  %v63 = vld [vmem:[%s2 + $0x70] sm:$0xff]
  %v64 = vld [vmem:[%s2 + $0x78] sm:$0xff]
  %65 = vmatprep.subr.mxu0 0.0
  %66 = vmatpush1.msra.mxu0 %v49
  %67 = vmatprep.subr.mxu0 0.0
  %68 = vmatpush1.msra.mxu0 %v50
  %69 = vmatprep.subr.mxu0 0.0
  %70 = vmatpush1.msra.mxu0 %v51
  %71 = vmatprep.subr.mxu0 0.0
  %72 = vmatpush1.msra.mxu0 %v52
  %73 = vmatprep.subr.mxu0 0.0
  %74 = vmatpush1.msra.mxu0 %v53
  %75 = vmatprep.subr.mxu0 0.0
  %76 = vmatpush1.msra.mxu0 %v54
  %77 = vmatprep.subr.mxu0 0.0
  %78 = vmatpush1.msra.mxu0 %v55
  %79 = vmatprep.subr.mxu0 0.0
  %80 = vmatpush1.msra.mxu0 %v56
  %81 = vmatprep.subr.mxu0 0.0
  %82 = vmatpush1.msra.mxu0 %v57
  %83 = vmatprep.subr.mxu0 0.0
  %84 = vmatpush1.msra.mxu0 %v58
  %85 = vmatprep.subr.mxu0 0.0
  %86 = vmatpush1.msra.mxu0 %v59
  %87 = vmatprep.subr.mxu0 0.0
  %88 = vmatpush1.msra.mxu0 %v60
  %89 = vmatprep.subr.mxu0 0.0
  %90 = vmatpush1.msra.mxu0 %v61
  %91 = vmatprep.subr.mxu0 0.0
  %92 = vmatpush1.msra.mxu0 %v62
  %93 = vmatprep.subr.mxu0 0.0
  %94 = vmatpush1.msra.mxu0 %v63
  %95 = vmatprep.subr.mxu0 0.0
  %96 = vmatpush1.msra.mxu0 %v64
  %97 = vmatprep.subr.mxu0 0.0
  %98 = vmatpush1.msra.mxu0 0.0
  %99 = vmatprep.subr.mxu0 0.0
  %100 = vmatpush1.msra.mxu0 0.0
  %101 = vmatprep.subr.mxu0 0.0
  %102 = vmatpush1.msra.mxu0 0.0
  %103 = vmatprep.subr.mxu0 0.0
  %104 = vmatpush1.msra.mxu0 0.0
  %105 = vmatprep.subr.mxu0 0.0
  %106 = vmatpush1.msra.mxu0 0.0
  %107 = vmatprep.subr.mxu0 0.0
  %108 = vmatpush1.msra.mxu0 0.0
  %109 = vmatprep.subr.mxu0 0.0
  %110 = vmatpush1.msra.mxu0 0.0
  %111 = vmatprep.subr.mxu0 0.0
  %112 = vmatpush1.msra.mxu0 0.0
  %113 = vmatprep.subr.mxu0 0.0
  %114 = vmatpush1.msra.mxu0 0.0
  %115 = vmatprep.subr.mxu0 0.0
  %116 = vmatpush1.msra.mxu0 0.0
  %117 = vmatprep.subr.mxu0 0.0
  %118 = vmatpush1.msra.mxu0 0.0
  %119 = vmatprep.subr.mxu0 0.0
  %120 = vmatpush1.msra.mxu0 0.0
  %121 = vmatprep.subr.mxu0 0.0
  %122 = vmatpush1.msra.mxu0 0.0
  %123 = vmatprep.subr.mxu0 0.0
  %124 = vmatpush1.msra.mxu0 0.0
  %125 = vmatprep.subr.mxu0 0.0
  %126 = vmatpush1.msra.mxu0 0.0
  %127 = vmatprep.subr.mxu0 0.0
  %128 = vmatpush1.msra.mxu0 0.0
  %129 = vmatprep.mubr.f32.mxu0 0.0
  %130 = vmatmul.mubr.f32.gmra.mrb[0].mxu0 %v47
  %v131 = vpop.f32.mrb[0].mxu0
  %v132 = vadd.f32 0.0, %v131
  %v133 = vpop.f32.mrb[0].mxu0
  %134 = vdwg.mxu0
  %v135 = vadd.f32 %v48, %v132
  %136 = vst [vmem:[#allocation2] sm:$0xff] %v135
  // Predicated region
  $region42: #{ugp_v1_forward.1} parent=0 // pred_check
    %p137 = pneg %p34
  $region43: #{ugp_v1_forward.1} parent=0 // pred_check_branch
    %139 = sbr.rel (%p137) target = $region45
  $region44: #{ugp_v1_forward.1} parent=0 // pred_region
    %v140 = vld [vmem:[#allocation2] sm:$0xff]
    %v141 = vld [vmem:[%s3] sm:$0xff]
    %v142 = vld [vmem:[%s3 + $0x8] sm:$0xff]
    %v143 = vld [vmem:[%s3 + $0x10] sm:$0xff]
    %v144 = vld [vmem:[%s3 + $0x18] sm:$0xff]
    %v145 = vld [vmem:[%s3 + $0x20] sm:$0xff]
    %v146 = vld [vmem:[%s3 + $0x28] sm:$0xff]
    %v147 = vld [vmem:[%s3 + $0x30] sm:$0xff]
    %v148 = vld [vmem:[%s3 + $0x38] sm:$0xff]
    %v149 = vld [vmem:[%s3 + $0x40] sm:$0xff]
    %v150 = vld [vmem:[%s3 + $0x48] sm:$0xff]
    %v151 = vld [vmem:[%s3 + $0x50] sm:$0xff]
    %v152 = vld [vmem:[%s3 + $0x58] sm:$0xff]
    %v153 = vld [vmem:[%s3 + $0x60] sm:$0xff]
    %v154 = vld [vmem:[%s3 + $0x68] sm:$0xff]
    %v155 = vld [vmem:[%s3 + $0x70] sm:$0xff]
    %v156 = vld [vmem:[%s3 + $0x78] sm:$0xff]
    %v157 = vld [vmem:[%s3 + $0x80] sm:$0xff]
    %v158 = vld [vmem:[%s3 + $0x88] sm:$0xff]
    %v159 = vld [vmem:[%s3 + $0x90] sm:$0xff]
    %v160 = vld [vmem:[%s3 + $0x98] sm:$0xff]
    %v161 = vld [vmem:[%s3 + $0xa0] sm:$0xff]
    %v162 = vld [vmem:[%s3 + $0xa8] sm:$0xff]
    %v163 = vld [vmem:[%s3 + $0xb0] sm:$0xff]
    %v164 = vld [vmem:[%s3 + $0xb8] sm:$0xff]
    %v165 = vld [vmem:[%s3 + $0xc0] sm:$0xff]
    %v166 = vld [vmem:[%s3 + $0xc8] sm:$0xff]
    %v167 = vld [vmem:[%s3 + $0xd0] sm:$0xff]
    %v168 = vld [vmem:[%s3 + $0xd8] sm:$0xff]
    %v169 = vld [vmem:[%s3 + $0xe0] sm:$0xff]
    %v170 = vld [vmem:[%s3 + $0xe8] sm:$0xff]
    %v171 = vld [vmem:[%s3 + $0xf0] sm:$0xff]
    %v172 = vld [vmem:[%s3 + $0xf8] sm:$0xff]
    %v173 = vld [vmem:[%s3 + $0x100] sm:$0xff]
    %v174 = vld [vmem:[%s3 + $0x108] sm:$0xff]
    %v175 = vld [vmem:[%s3 + $0x110] sm:$0xff]
    %v176 = vld [vmem:[%s3 + $0x118] sm:$0xff]
    %v177 = vld [vmem:[%s3 + $0x120] sm:$0xff]
    %v178 = vld [vmem:[%s3 + $0x128] sm:$0xff]
    %v179 = vld [vmem:[%s3 + $0x130] sm:$0xff]
    %v180 = vld [vmem:[%s3 + $0x138] sm:$0xff]
    %v181 = vld [vmem:[%s3 + $0x140] sm:$0xff]
    %v182 = vld [vmem:[%s3 + $0x148] sm:$0xff]
    %v183 = vld [vmem:[%s3 + $0x150] sm:$0xff]
    %v184 = vld [vmem:[%s3 + $0x158] sm:$0xff]
    %v185 = vld [vmem:[%s3 + $0x160] sm:$0xff]
    %v186 = vld [vmem:[%s3 + $0x168] sm:$0xff]
    %v187 = vld [vmem:[%s3 + $0x170] sm:$0xff]
    %v188 = vld [vmem:[%s3 + $0x178] sm:$0xff]
    %v189 = vld [vmem:[%s3 + $0x180] sm:$0xff]
    %v190 = vld [vmem:[%s3 + $0x188] sm:$0xff]
    %v191 = vld [vmem:[%s3 + $0x190] sm:$0xff]
    %v192 = vld [vmem:[%s3 + $0x198] sm:$0xff]
    %v193 = vld [vmem:[%s3 + $0x1a0] sm:$0xff]
    %v194 = vld [vmem:[%s3 + $0x1a8] sm:$0xff]
    %v195 = vld [vmem:[%s3 + $0x1b0] sm:$0xff]
    %v196 = vld [vmem:[%s3 + $0x1b8] sm:$0xff]
    %v197 = vld [vmem:[%s3 + $0x1c0] sm:$0xff]
    %v198 = vld [vmem:[%s3 + $0x1c8] sm:$0xff]
    %v199 = vld [vmem:[%s3 + $0x1d0] sm:$0xff]
    %v200 = vld [vmem:[%s3 + $0x1d8] sm:$0xff]
    %v201 = vld [vmem:[%s3 + $0x1e0] sm:$0xff]
    %v202 = vld [vmem:[%s3 + $0x1e8] sm:$0xff]
    %v203 = vld [vmem:[%s3 + $0x1f0] sm:$0xff]
    %v204 = vld [vmem:[%s3 + $0x1f8] sm:$0xff]
    %v205 = vld [vmem:[%s3 + $0x200] sm:$0xff]
    %v206 = vld [vmem:[%s3 + $0x208] sm:$0xff]
    %v207 = vld [vmem:[%s3 + $0x210] sm:$0xff]
    %v208 = vld [vmem:[%s3 + $0x218] sm:$0xff]
    %v209 = vld [vmem:[%s3 + $0x220] sm:$0xff]
    %v210 = vld [vmem:[%s3 + $0x228] sm:$0xff]
    %v211 = vld [vmem:[%s3 + $0x230] sm:$0xff]
    %v212 = vld [vmem:[%s3 + $0x238] sm:$0xff]
    %v213 = vld [vmem:[%s3 + $0x240] sm:$0xff]
    %v214 = vld [vmem:[%s3 + $0x248] sm:$0xff]
    %v215 = vld [vmem:[%s3 + $0x250] sm:$0xff]
    %v216 = vld [vmem:[%s3 + $0x258] sm:$0xff]
    %v217 = vld [vmem:[%s3 + $0x260] sm:$0xff]
    %v218 = vld [vmem:[%s3 + $0x268] sm:$0xff]
    %v219 = vld [vmem:[%s3 + $0x270] sm:$0xff]
    %v220 = vld [vmem:[%s3 + $0x278] sm:$0xff]
    %v221 = vld [vmem:[%s3 + $0x280] sm:$0xff]
    %v222 = vld [vmem:[%s3 + $0x288] sm:$0xff]
    %v223 = vld [vmem:[%s3 + $0x290] sm:$0xff]
    %v224 = vld [vmem:[%s3 + $0x298] sm:$0xff]
    %v225 = vld [vmem:[%s3 + $0x2a0] sm:$0xff]
    %v226 = vld [vmem:[%s3 + $0x2a8] sm:$0xff]
    %v227 = vld [vmem:[%s3 + $0x2b0] sm:$0xff]
    %v228 = vld [vmem:[%s3 + $0x2b8] sm:$0xff]
    %v229 = vld [vmem:[%s3 + $0x2c0] sm:$0xff]
    %v230 = vld [vmem:[%s3 + $0x2c8] sm:$0xff]
    %v231 = vld [vmem:[%s3 + $0x2d0] sm:$0xff]
    %v232 = vld [vmem:[%s3 + $0x2d8] sm:$0xff]
    %v233 = vld [vmem:[%s3 + $0x2e0] sm:$0xff]
    %v234 = vld [vmem:[%s3 + $0x2e8] sm:$0xff]
    %v235 = vld [vmem:[%s3 + $0x2f0] sm:$0xff]
    %v236 = vld [vmem:[%s3 + $0x2f8] sm:$0xff]
    %v237 = vld [vmem:[%s3 + $0x300] sm:$0xff]
    %v238 = vld [vmem:[%s3 + $0x308] sm:$0xff]
    %v239 = vld [vmem:[%s3 + $0x310] sm:$0xff]
    %v240 = vld [vmem:[%s3 + $0x318] sm:$0xff]
    %v241 = vld [vmem:[%s3 + $0x320] sm:$0xff]
    %v242 = vld [vmem:[%s3 + $0x328] sm:$0xff]
    %v243 = vld [vmem:[%s3 + $0x330] sm:$0xff]
    %v244 = vld [vmem:[%s3 + $0x338] sm:$0xff]
    %v245 = vld [vmem:[%s3 + $0x340] sm:$0xff]
    %v246 = vld [vmem:[%s3 + $0x348] sm:$0xff]
    %v247 = vld [vmem:[%s3 + $0x350] sm:$0xff]
    %v248 = vld [vmem:[%s3 + $0x358] sm:$0xff]
    %v249 = vld [vmem:[%s3 + $0x360] sm:$0xff]
    %v250 = vld [vmem:[%s3 + $0x368] sm:$0xff]
    %v251 = vld [vmem:[%s3 + $0x370] sm:$0xff]
    %v252 = vld [vmem:[%s3 + $0x378] sm:$0xff]
    %v253 = vld [vmem:[%s3 + $0x380] sm:$0xff]
    %v254 = vld [vmem:[%s3 + $0x388] sm:$0xff]
    %v255 = vld [vmem:[%s3 + $0x390] sm:$0xff]
    %v256 = vld [vmem:[%s3 + $0x398] sm:$0xff]
    %v257 = vld [vmem:[%s3 + $0x3a0] sm:$0xff]
    %v258 = vld [vmem:[%s3 + $0x3a8] sm:$0xff]
    %v259 = vld [vmem:[%s3 + $0x3b0] sm:$0xff]
    %v260 = vld [vmem:[%s3 + $0x3b8] sm:$0xff]
    %v261 = vld [vmem:[%s3 + $0x3c0] sm:$0xff]
    %v262 = vld [vmem:[%s3 + $0x3c8] sm:$0xff]
    %v263 = vld [vmem:[%s3 + $0x3d0] sm:$0xff]
    %v264 = vld [vmem:[%s3 + $0x3d8] sm:$0xff]
    %v265 = vld [vmem:[%s3 + $0x3e0] sm:$0xff]
    %v266 = vld [vmem:[%s3 + $0x3e8] sm:$0xff]
    %v267 = vld [vmem:[%s3 + $0x3f0] sm:$0xff]
    %v268 = vld [vmem:[%s3 + $0x3f8] sm:$0xff]
    %v269 = vld [vmem:[%s4] sm:$0xff]
    %v271 = vlaneseq
    %v272 = vshrl.u32 %v271, 7
    %v273 = vsub.s32 0, %v272
    %v274 = vrot.slane %v269, %v273
    %v275 = vlaneseq
    %v276 = vshrl.u32 %v275, 7
    %v277 = vsub.s32 1, %v276
    %v278 = vrot.slane %v269, %v277
    %v279 = vlaneseq
    %v280 = vshrl.u32 %v279, 7
    %v281 = vsub.s32 2, %v280
    %v282 = vrot.slane %v269, %v281
    %v283 = vlaneseq
    %v284 = vshrl.u32 %v283, 7
    %v285 = vsub.s32 3, %v284
    %v286 = vrot.slane %v269, %v285
    %v287 = vlaneseq
    %v288 = vshrl.u32 %v287, 7
    %v289 = vsub.s32 4, %v288
    %v290 = vrot.slane %v269, %v289
    %v291 = vlaneseq
    %v292 = vshrl.u32 %v291, 7
    %v293 = vsub.s32 5, %v292
    %v294 = vrot.slane %v269, %v293
    %v295 = vlaneseq
    %v296 = vshrl.u32 %v295, 7
    %v297 = vsub.s32 6, %v296
    %v298 = vrot.slane %v269, %v297
    %v299 = vlaneseq
    %v300 = vshrl.u32 %v299, 7
    %v301 = vsub.s32 7, %v300
    %v302 = vrot.slane %v269, %v301
    %311 = vmatprep.subr.mxu0 %v142
    %312 = vmatpush1.msra.mxu0 %v141
    %313 = vmatprep.subr.mxu0 %v150
    %314 = vmatpush1.msra.mxu0 %v149
    %315 = vmatprep.subr.mxu0 %v158
    %316 = vmatpush1.msra.mxu0 %v157
    %317 = vmatprep.subr.mxu0 %v166
    %318 = vmatpush1.msra.mxu0 %v165
    %319 = vmatprep.subr.mxu0 %v174
    %320 = vmatpush1.msra.mxu0 %v173
    %321 = vmatprep.subr.mxu0 %v182
    %322 = vmatpush1.msra.mxu0 %v181
    %323 = vmatprep.subr.mxu0 %v190
    %324 = vmatpush1.msra.mxu0 %v189
    %325 = vmatprep.subr.mxu0 %v198
    %326 = vmatpush1.msra.mxu0 %v197
    %327 = vmatprep.subr.mxu0 %v206
    %328 = vmatpush1.msra.mxu0 %v205
    %329 = vmatprep.subr.mxu0 %v214
    %330 = vmatpush1.msra.mxu0 %v213
    %331 = vmatprep.subr.mxu0 %v222
    %332 = vmatpush1.msra.mxu0 %v221
    %333 = vmatprep.subr.mxu0 %v230
    %334 = vmatpush1.msra.mxu0 %v229
    %335 = vmatprep.subr.mxu0 %v238
    %336 = vmatpush1.msra.mxu0 %v237
    %337 = vmatprep.subr.mxu0 %v246
    %338 = vmatpush1.msra.mxu0 %v245
    %339 = vmatprep.subr.mxu0 %v254
    %340 = vmatpush1.msra.mxu0 %v253
    %341 = vmatprep.subr.mxu0 %v262
    %342 = vmatpush1.msra.mxu0 %v261
    %343 = vmatprep.subr.mxu0 0.0
    %344 = vmatpush1.msra.mxu0 0.0
    %345 = vmatprep.subr.mxu0 0.0
    %346 = vmatpush1.msra.mxu0 0.0
    %347 = vmatprep.subr.mxu0 0.0
    %348 = vmatpush1.msra.mxu0 0.0
    %349 = vmatprep.subr.mxu0 0.0
    %350 = vmatpush1.msra.mxu0 0.0
    %351 = vmatprep.subr.mxu0 0.0
    %352 = vmatpush1.msra.mxu0 0.0
    %353 = vmatprep.subr.mxu0 0.0
    %354 = vmatpush1.msra.mxu0 0.0
    %355 = vmatprep.subr.mxu0 0.0
    %356 = vmatpush1.msra.mxu0 0.0
    %357 = vmatprep.subr.mxu0 0.0
    %358 = vmatpush1.msra.mxu0 0.0
    %359 = vmatprep.subr.mxu0 0.0
    %360 = vmatpush1.msra.mxu0 0.0
    %361 = vmatprep.subr.mxu0 0.0
    %362 = vmatpush1.msra.mxu0 0.0
    %363 = vmatprep.subr.mxu0 0.0
    %364 = vmatpush1.msra.mxu0 0.0
    %365 = vmatprep.subr.mxu0 0.0
    %366 = vmatpush1.msra.mxu0 0.0
    %367 = vmatprep.subr.mxu0 0.0
    %368 = vmatpush1.msra.mxu0 0.0
    %369 = vmatprep.subr.mxu0 0.0
    %370 = vmatpush1.msra.mxu0 0.0
    %371 = vmatprep.subr.mxu0 0.0
    %372 = vmatpush1.msra.mxu0 0.0
    %373 = vmatprep.subr.mxu0 0.0
    %374 = vmatpush1.msra.mxu0 0.0
    %375 = vmatprep.mubr.f32.mxu0 0.0
    %376 = vmatmul.mubr.f32.gmra.mrb[0].mxu0 %v140
    %v377 = vpop.f32.mrb[0].mxu0
    %v378 = vadd.f32 %v274, %v377
    %v379 = vpop.f32.mrb[0].mxu0
    %v380 = vadd.f32 %v278, %v379
    %381 = vdwg.mxu0
    %382 = vmatprep.subr.mxu0 %v144
    %383 = vmatpush1.msra.mxu0 %v143
    %384 = vmatprep.subr.mxu0 %v152
    %385 = vmatpush1.msra.mxu0 %v151
    %386 = vmatprep.subr.mxu0 %v160
    %387 = vmatpush1.msra.mxu0 %v159
    %388 = vmatprep.subr.mxu0 %v168
    %389 = vmatpush1.msra.mxu0 %v167
    %390 = vmatprep.subr.mxu0 %v176
    %391 = vmatpush1.msra.mxu0 %v175
    %392 = vmatprep.subr.mxu0 %v184
    %393 = vmatpush1.msra.mxu0 %v183
    %394 = vmatprep.subr.mxu0 %v192
    %395 = vmatpush1.msra.mxu0 %v191
    %396 = vmatprep.subr.mxu0 %v200
    %397 = vmatpush1.msra.mxu0 %v199
    %398 = vmatprep.subr.mxu0 %v208
    %399 = vmatpush1.msra.mxu0 %v207
    %400 = vmatprep.subr.mxu0 %v216
    %401 = vmatpush1.msra.mxu0 %v215
    %402 = vmatprep.subr.mxu0 %v224
    %403 = vmatpush1.msra.mxu0 %v223
    %404 = vmatprep.subr.mxu0 %v232
    %405 = vmatpush1.msra.mxu0 %v231
    %406 = vmatprep.subr.mxu0 %v240
    %407 = vmatpush1.msra.mxu0 %v239
    %408 = vmatprep.subr.mxu0 %v248
    %409 = vmatpush1.msra.mxu0 %v247
    %410 = vmatprep.subr.mxu0 %v256
    %411 = vmatpush1.msra.mxu0 %v255
    %412 = vmatprep.subr.mxu0 %v264
    %413 = vmatpush1.msra.mxu0 %v263
    %414 = vmatprep.subr.mxu0 0.0
    %415 = vmatpush1.msra.mxu0 0.0
    %416 = vmatprep.subr.mxu0 0.0
    %417 = vmatpush1.msra.mxu0 0.0
    %418 = vmatprep.subr.mxu0 0.0
    %419 = vmatpush1.msra.mxu0 0.0
    %420 = vmatprep.subr.mxu0 0.0
    %421 = vmatpush1.msra.mxu0 0.0
    %422 = vmatprep.subr.mxu0 0.0
    %423 = vmatpush1.msra.mxu0 0.0
    %424 = vmatprep.subr.mxu0 0.0
    %425 = vmatpush1.msra.mxu0 0.0
    %426 = vmatprep.subr.mxu0 0.0
    %427 = vmatpush1.msra.mxu0 0.0
    %428 = vmatprep.subr.mxu0 0.0
    %429 = vmatpush1.msra.mxu0 0.0
    %430 = vmatprep.subr.mxu0 0.0
    %431 = vmatpush1.msra.mxu0 0.0
    %432 = vmatprep.subr.mxu0 0.0
    %433 = vmatpush1.msra.mxu0 0.0
    %434 = vmatprep.subr.mxu0 0.0
    %435 = vmatpush1.msra.mxu0 0.0
    %436 = vmatprep.subr.mxu0 0.0
    %437 = vmatpush1.msra.mxu0 0.0
    %438 = vmatprep.subr.mxu0 0.0
    %439 = vmatpush1.msra.mxu0 0.0
    %440 = vmatprep.subr.mxu0 0.0
    %441 = vmatpush1.msra.mxu0 0.0
    %442 = vmatprep.subr.mxu0 0.0
    %443 = vmatpush1.msra.mxu0 0.0
    %444 = vmatprep.subr.mxu0 0.0
    %445 = vmatpush1.msra.mxu0 0.0
    %446 = vmatprep.mubr.f32.mxu0 0.0
    %447 = vmatmul.mubr.f32.gmra.mrb[0].mxu0 %v140
    %v448 = vpop.f32.mrb[0].mxu0
    %v449 = vadd.f32 %v282, %v448
    %v450 = vpop.f32.mrb[0].mxu0
    %v451 = vadd.f32 %v286, %v450
    %452 = vdwg.mxu0
    %453 = vmatprep.subr.mxu0 %v146
    %454 = vmatpush1.msra.mxu0 %v145
    %455 = vmatprep.subr.mxu0 %v154
    %456 = vmatpush1.msra.mxu0 %v153
    %457 = vmatprep.subr.mxu0 %v162
    %458 = vmatpush1.msra.mxu0 %v161
    %459 = vmatprep.subr.mxu0 %v170
    %460 = vmatpush1.msra.mxu0 %v169
    %461 = vmatprep.subr.mxu0 %v178
    %462 = vmatpush1.msra.mxu0 %v177
    %463 = vmatprep.subr.mxu0 %v186
    %464 = vmatpush1.msra.mxu0 %v185
    %465 = vmatprep.subr.mxu0 %v194
    %466 = vmatpush1.msra.mxu0 %v193
    %467 = vmatprep.subr.mxu0 %v202
    %468 = vmatpush1.msra.mxu0 %v201
    %469 = vmatprep.subr.mxu0 %v210
    %470 = vmatpush1.msra.mxu0 %v209
    %471 = vmatprep.subr.mxu0 %v218
    %472 = vmatpush1.msra.mxu0 %v217
    %473 = vmatprep.subr.mxu0 %v226
    %474 = vmatpush1.msra.mxu0 %v225
    %475 = vmatprep.subr.mxu0 %v234
    %476 = vmatpush1.msra.mxu0 %v233
    %477 = vmatprep.subr.mxu0 %v242
    %478 = vmatpush1.msra.mxu0 %v241
    %479 = vmatprep.subr.mxu0 %v250
    %480 = vmatpush1.msra.mxu0 %v249
    %481 = vmatprep.subr.mxu0 %v258
    %482 = vmatpush1.msra.mxu0 %v257
    %483 = vmatprep.subr.mxu0 %v266
    %484 = vmatpush1.msra.mxu0 %v265
    %485 = vmatprep.subr.mxu0 0.0
    %486 = vmatpush1.msra.mxu0 0.0
    %487 = vmatprep.subr.mxu0 0.0
    %488 = vmatpush1.msra.mxu0 0.0
    %489 = vmatprep.subr.mxu0 0.0
    %490 = vmatpush1.msra.mxu0 0.0
    %491 = vmatprep.subr.mxu0 0.0
    %492 = vmatpush1.msra.mxu0 0.0
    %493 = vmatprep.subr.mxu0 0.0
    %494 = vmatpush1.msra.mxu0 0.0
    %495 = vmatprep.subr.mxu0 0.0
    %496 = vmatpush1.msra.mxu0 0.0
    %497 = vmatprep.subr.mxu0 0.0
    %498 = vmatpush1.msra.mxu0 0.0
    %499 = vmatprep.subr.mxu0 0.0
    %500 = vmatpush1.msra.mxu0 0.0
    %501 = vmatprep.subr.mxu0 0.0
    %502 = vmatpush1.msra.mxu0 0.0
    %503 = vmatprep.subr.mxu0 0.0
    %504 = vmatpush1.msra.mxu0 0.0
    %505 = vmatprep.subr.mxu0 0.0
    %506 = vmatpush1.msra.mxu0 0.0
    %507 = vmatprep.subr.mxu0 0.0
    %508 = vmatpush1.msra.mxu0 0.0
    %509 = vmatprep.subr.mxu0 0.0
    %510 = vmatpush1.msra.mxu0 0.0
    %511 = vmatprep.subr.mxu0 0.0
    %512 = vmatpush1.msra.mxu0 0.0
    %513 = vmatprep.subr.mxu0 0.0
    %514 = vmatpush1.msra.mxu0 0.0
    %515 = vmatprep.subr.mxu0 0.0
    %516 = vmatpush1.msra.mxu0 0.0
    %517 = vmatprep.mubr.f32.mxu0 0.0
    %518 = vmatmul.mubr.f32.gmra.mrb[0].mxu0 %v140
    %v519 = vpop.f32.mrb[0].mxu0
    %v520 = vadd.f32 %v290, %v519
    %v521 = vpop.f32.mrb[0].mxu0
    %v522 = vadd.f32 %v294, %v521
    %523 = vdwg.mxu0
    %524 = vmatprep.subr.mxu0 %v148
    %525 = vmatpush1.msra.mxu0 %v147
    %526 = vmatprep.subr.mxu0 %v156
    %527 = vmatpush1.msra.mxu0 %v155
    %528 = vmatprep.subr.mxu0 %v164
    %529 = vmatpush1.msra.mxu0 %v163
    %530 = vmatprep.subr.mxu0 %v172
    %531 = vmatpush1.msra.mxu0 %v171
    %532 = vmatprep.subr.mxu0 %v180
    %533 = vmatpush1.msra.mxu0 %v179
    %534 = vmatprep.subr.mxu0 %v188
    %535 = vmatpush1.msra.mxu0 %v187
    %536 = vmatprep.subr.mxu0 %v196
    %537 = vmatpush1.msra.mxu0 %v195
    %538 = vmatprep.subr.mxu0 %v204
    %539 = vmatpush1.msra.mxu0 %v203
    %540 = vmatprep.subr.mxu0 %v212
    %541 = vmatpush1.msra.mxu0 %v211
    %542 = vmatprep.subr.mxu0 %v220
    %543 = vmatpush1.msra.mxu0 %v219
    %544 = vmatprep.subr.mxu0 %v228
    %545 = vmatpush1.msra.mxu0 %v227
    %546 = vmatprep.subr.mxu0 %v236
    %547 = vmatpush1.msra.mxu0 %v235
    %548 = vmatprep.subr.mxu0 %v244
    %549 = vmatpush1.msra.mxu0 %v243
    %550 = vmatprep.subr.mxu0 %v252
    %551 = vmatpush1.msra.mxu0 %v251
    %552 = vmatprep.subr.mxu0 %v260
    %553 = vmatpush1.msra.mxu0 %v259
    %554 = vmatprep.subr.mxu0 %v268
    %555 = vmatpush1.msra.mxu0 %v267
    %556 = vmatprep.subr.mxu0 0.0
    %557 = vmatpush1.msra.mxu0 0.0
    %558 = vmatprep.subr.mxu0 0.0
    %559 = vmatpush1.msra.mxu0 0.0
    %560 = vmatprep.subr.mxu0 0.0
    %561 = vmatpush1.msra.mxu0 0.0
    %562 = vmatprep.subr.mxu0 0.0
    %563 = vmatpush1.msra.mxu0 0.0
    %564 = vmatprep.subr.mxu0 0.0
    %565 = vmatpush1.msra.mxu0 0.0
    %566 = vmatprep.subr.mxu0 0.0
    %567 = vmatpush1.msra.mxu0 0.0
    %568 = vmatprep.subr.mxu0 0.0
    %569 = vmatpush1.msra.mxu0 0.0
    %570 = vmatprep.subr.mxu0 0.0
    %571 = vmatpush1.msra.mxu0 0.0
    %572 = vmatprep.subr.mxu0 0.0
    %573 = vmatpush1.msra.mxu0 0.0
    %574 = vmatprep.subr.mxu0 0.0
    %575 = vmatpush1.msra.mxu0 0.0
    %576 = vmatprep.subr.mxu0 0.0
    %577 = vmatpush1.msra.mxu0 0.0
    %578 = vmatprep.subr.mxu0 0.0
    %579 = vmatpush1.msra.mxu0 0.0
    %580 = vmatprep.subr.mxu0 0.0
    %581 = vmatpush1.msra.mxu0 0.0
    %582 = vmatprep.subr.mxu0 0.0
    %583 = vmatpush1.msra.mxu0 0.0
    %584 = vmatprep.subr.mxu0 0.0
    %585 = vmatpush1.msra.mxu0 0.0
    %586 = vmatprep.subr.mxu0 0.0
    %587 = vmatpush1.msra.mxu0 0.0
    %588 = vmatprep.mubr.f32.mxu0 0.0
    %589 = vmatmul.mubr.f32.gmra.mrb[0].mxu0 %v140
    %v590 = vpop.f32.mrb[0].mxu0
    %v591 = vadd.f32 %v298, %v590
    %v592 = vpop.f32.mrb[0].mxu0
    %v593 = vadd.f32 %v302, %v592
    %594 = vdwg.mxu0
    %v595 = vmax.f32 %v378, 0.0
    %v596 = vmax.f32 %v380, 0.0
    %v597 = vmax.f32 %v449, 0.0
    %v598 = vmax.f32 %v451, 0.0
    %v599 = vmax.f32 %v520, 0.0
    %v600 = vmax.f32 %v522, 0.0
    %v601 = vmax.f32 %v591, 0.0
    %v602 = vmax.f32 %v593, 0.0
    %v603 = vld [vmem:[%s5] sm:$0xff]
    %v604 = vld [vmem:[%s5 + $0x8] sm:$0xff]
    %v605 = vld [vmem:[%s5 + $0x10] sm:$0xff]
    %v606 = vld [vmem:[%s5 + $0x18] sm:$0xff]
    %v607 = vld [vmem:[%s5 + $0x20] sm:$0xff]
    %v608 = vld [vmem:[%s5 + $0x28] sm:$0xff]
    %v609 = vld [vmem:[%s5 + $0x30] sm:$0xff]
    %v610 = vld [vmem:[%s5 + $0x38] sm:$0xff]
    %v611 = vld [vmem:[%s5 + $0x40] sm:$0xff]
    %v612 = vld [vmem:[%s5 + $0x48] sm:$0xff]
    %v613 = vld [vmem:[%s5 + $0x50] sm:$0xff]
    %v614 = vld [vmem:[%s5 + $0x58] sm:$0xff]
    %v615 = vld [vmem:[%s5 + $0x60] sm:$0xff]
    %v616 = vld [vmem:[%s5 + $0x68] sm:$0xff]
    %v617 = vld [vmem:[%s5 + $0x70] sm:$0xff]
    %v618 = vld [vmem:[%s5 + $0x78] sm:$0xff]
    %v619 = vld [vmem:[%s5 + $0x80] sm:$0xff]
    %v620 = vld [vmem:[%s5 + $0x88] sm:$0xff]
    %v621 = vld [vmem:[%s5 + $0x90] sm:$0xff]
    %v622 = vld [vmem:[%s5 + $0x98] sm:$0xff]
    %v623 = vld [vmem:[%s5 + $0xa0] sm:$0xff]
    %v624 = vld [vmem:[%s5 + $0xa8] sm:$0xff]
    %v625 = vld [vmem:[%s5 + $0xb0] sm:$0xff]
    %v626 = vld [vmem:[%s5 + $0xb8] sm:$0xff]
    %v627 = vld [vmem:[%s5 + $0xc0] sm:$0xff]
    %v628 = vld [vmem:[%s5 + $0xc8] sm:$0xff]
    %v629 = vld [vmem:[%s5 + $0xd0] sm:$0xff]
    %v630 = vld [vmem:[%s5 + $0xd8] sm:$0xff]
    %v631 = vld [vmem:[%s5 + $0xe0] sm:$0xff]
    %v632 = vld [vmem:[%s5 + $0xe8] sm:$0xff]
    %v633 = vld [vmem:[%s5 + $0xf0] sm:$0xff]
    %v634 = vld [vmem:[%s5 + $0xf8] sm:$0xff]
    %v635 = vld [vmem:[%s5 + $0x100] sm:$0xff]
    %v636 = vld [vmem:[%s5 + $0x108] sm:$0xff]
    %v637 = vld [vmem:[%s5 + $0x110] sm:$0xff]
    %v638 = vld [vmem:[%s5 + $0x118] sm:$0xff]
    %v639 = vld [vmem:[%s5 + $0x120] sm:$0xff]
    %v640 = vld [vmem:[%s5 + $0x128] sm:$0xff]
    %v641 = vld [vmem:[%s5 + $0x130] sm:$0xff]
    %v642 = vld [vmem:[%s5 + $0x138] sm:$0xff]
    %v643 = vld [vmem:[%s5 + $0x140] sm:$0xff]
    %v644 = vld [vmem:[%s5 + $0x148] sm:$0xff]
    %v645 = vld [vmem:[%s5 + $0x150] sm:$0xff]
    %v646 = vld [vmem:[%s5 + $0x158] sm:$0xff]
    %v647 = vld [vmem:[%s5 + $0x160] sm:$0xff]
    %v648 = vld [vmem:[%s5 + $0x168] sm:$0xff]
    %v649 = vld [vmem:[%s5 + $0x170] sm:$0xff]
    %v650 = vld [vmem:[%s5 + $0x178] sm:$0xff]
    %v651 = vld [vmem:[%s5 + $0x180] sm:$0xff]
    %v652 = vld [vmem:[%s5 + $0x188] sm:$0xff]
    %v653 = vld [vmem:[%s5 + $0x190] sm:$0xff]
    %v654 = vld [vmem:[%s5 + $0x198] sm:$0xff]
    %v655 = vld [vmem:[%s5 + $0x1a0] sm:$0xff]
    %v656 = vld [vmem:[%s5 + $0x1a8] sm:$0xff]
    %v657 = vld [vmem:[%s5 + $0x1b0] sm:$0xff]
    %v658 = vld [vmem:[%s5 + $0x1b8] sm:$0xff]
    %v659 = vld [vmem:[%s5 + $0x1c0] sm:$0xff]
    %v660 = vld [vmem:[%s5 + $0x1c8] sm:$0xff]
    %v661 = vld [vmem:[%s5 + $0x1d0] sm:$0xff]
    %v662 = vld [vmem:[%s5 + $0x1d8] sm:$0xff]
    %v663 = vld [vmem:[%s5 + $0x1e0] sm:$0xff]
    %v664 = vld [vmem:[%s5 + $0x1e8] sm:$0xff]
    %v665 = vld [vmem:[%s5 + $0x1f0] sm:$0xff]
    %v666 = vld [vmem:[%s5 + $0x1f8] sm:$0xff]
    %v667 = vld [vmem:[%s5 + $0x200] sm:$0xff]
    %v668 = vld [vmem:[%s5 + $0x208] sm:$0xff]
    %v669 = vld [vmem:[%s5 + $0x210] sm:$0xff]
    %v670 = vld [vmem:[%s5 + $0x218] sm:$0xff]
    %v671 = vld [vmem:[%s5 + $0x220] sm:$0xff]
    %v672 = vld [vmem:[%s5 + $0x228] sm:$0xff]
    %v673 = vld [vmem:[%s5 + $0x230] sm:$0xff]
    %v674 = vld [vmem:[%s5 + $0x238] sm:$0xff]
    %v675 = vld [vmem:[%s5 + $0x240] sm:$0xff]
    %v676 = vld [vmem:[%s5 + $0x248] sm:$0xff]
    %v677 = vld [vmem:[%s5 + $0x250] sm:$0xff]
    %v678 = vld [vmem:[%s5 + $0x258] sm:$0xff]
    %v679 = vld [vmem:[%s5 + $0x260] sm:$0xff]
    %v680 = vld [vmem:[%s5 + $0x268] sm:$0xff]
    %v681 = vld [vmem:[%s5 + $0x270] sm:$0xff]
    %v682 = vld [vmem:[%s5 + $0x278] sm:$0xff]
    %v683 = vld [vmem:[%s5 + $0x280] sm:$0xff]
    %v684 = vld [vmem:[%s5 + $0x288] sm:$0xff]
    %v685 = vld [vmem:[%s5 + $0x290] sm:$0xff]
    %v686 = vld [vmem:[%s5 + $0x298] sm:$0xff]
    %v687 = vld [vmem:[%s5 + $0x2a0] sm:$0xff]
    %v688 = vld [vmem:[%s5 + $0x2a8] sm:$0xff]
    %v689 = vld [vmem:[%s5 + $0x2b0] sm:$0xff]
    %v690 = vld [vmem:[%s5 + $0x2b8] sm:$0xff]
    %v691 = vld [vmem:[%s5 + $0x2c0] sm:$0xff]
    %v692 = vld [vmem:[%s5 + $0x2c8] sm:$0xff]
    %v693 = vld [vmem:[%s5 + $0x2d0] sm:$0xff]
    %v694 = vld [vmem:[%s5 + $0x2d8] sm:$0xff]
    %v695 = vld [vmem:[%s5 + $0x2e0] sm:$0xff]
    %v696 = vld [vmem:[%s5 + $0x2e8] sm:$0xff]
    %v697 = vld [vmem:[%s5 + $0x2f0] sm:$0xff]
    %v698 = vld [vmem:[%s5 + $0x2f8] sm:$0xff]
    %v699 = vld [vmem:[%s5 + $0x300] sm:$0xff]
    %v700 = vld [vmem:[%s5 + $0x308] sm:$0xff]
    %v701 = vld [vmem:[%s5 + $0x310] sm:$0xff]
    %v702 = vld [vmem:[%s5 + $0x318] sm:$0xff]
    %v703 = vld [vmem:[%s5 + $0x320] sm:$0xff]
    %v704 = vld [vmem:[%s5 + $0x328] sm:$0xff]
    %v705 = vld [vmem:[%s5 + $0x330] sm:$0xff]
    %v706 = vld [vmem:[%s5 + $0x338] sm:$0xff]
    %v707 = vld [vmem:[%s5 + $0x340] sm:$0xff]
    %v708 = vld [vmem:[%s5 + $0x348] sm:$0xff]
    %v709 = vld [vmem:[%s5 + $0x350] sm:$0xff]
    %v710 = vld [vmem:[%s5 + $0x358] sm:$0xff]
    %v711 = vld [vmem:[%s5 + $0x360] sm:$0xff]
    %v712 = vld [vmem:[%s5 + $0x368] sm:$0xff]
    %v713 = vld [vmem:[%s5 + $0x370] sm:$0xff]
    %v714 = vld [vmem:[%s5 + $0x378] sm:$0xff]
    %v715 = vld [vmem:[%s5 + $0x380] sm:$0xff]
    %v716 = vld [vmem:[%s5 + $0x388] sm:$0xff]
    %v717 = vld [vmem:[%s5 + $0x390] sm:$0xff]
    %v718 = vld [vmem:[%s5 + $0x398] sm:$0xff]
    %v719 = vld [vmem:[%s5 + $0x3a0] sm:$0xff]
    %v720 = vld [vmem:[%s5 + $0x3a8] sm:$0xff]
    %v721 = vld [vmem:[%s5 + $0x3b0] sm:$0xff]
    %v722 = vld [vmem:[%s5 + $0x3b8] sm:$0xff]
    %v723 = vld [vmem:[%s5 + $0x3c0] sm:$0xff]
    %v724 = vld [vmem:[%s5 + $0x3c8] sm:$0xff]
    %v725 = vld [vmem:[%s5 + $0x3d0] sm:$0xff]
    %v726 = vld [vmem:[%s5 + $0x3d8] sm:$0xff]
    %v727 = vld [vmem:[%s5 + $0x3e0] sm:$0xff]
    %v728 = vld [vmem:[%s5 + $0x3e8] sm:$0xff]
    %v729 = vld [vmem:[%s5 + $0x3f0] sm:$0xff]
    %v730 = vld [vmem:[%s5 + $0x3f8] sm:$0xff]
    %v731 = vld [vmem:[%s5 + $0x400] sm:$0xff]
    %v732 = vld [vmem:[%s5 + $0x408] sm:$0xff]
    %v733 = vld [vmem:[%s5 + $0x410] sm:$0xff]
    %v734 = vld [vmem:[%s5 + $0x418] sm:$0xff]
    %v735 = vld [vmem:[%s5 + $0x420] sm:$0xff]
    %v736 = vld [vmem:[%s5 + $0x428] sm:$0xff]
    %v737 = vld [vmem:[%s5 + $0x430] sm:$0xff]
    %v738 = vld [vmem:[%s5 + $0x438] sm:$0xff]
    %v739 = vld [vmem:[%s5 + $0x440] sm:$0xff]
    %v740 = vld [vmem:[%s5 + $0x448] sm:$0xff]
    %v741 = vld [vmem:[%s5 + $0x450] sm:$0xff]
    %v742 = vld [vmem:[%s5 + $0x458] sm:$0xff]
    %v743 = vld [vmem:[%s5 + $0x460] sm:$0xff]
    %v744 = vld [vmem:[%s5 + $0x468] sm:$0xff]
    %v745 = vld [vmem:[%s5 + $0x470] sm:$0xff]
    %v746 = vld [vmem:[%s5 + $0x478] sm:$0xff]
    %v747 = vld [vmem:[%s5 + $0x480] sm:$0xff]
    %v748 = vld [vmem:[%s5 + $0x488] sm:$0xff]
    %v749 = vld [vmem:[%s5 + $0x490] sm:$0xff]
    %v750 = vld [vmem:[%s5 + $0x498] sm:$0xff]
    %v751 = vld [vmem:[%s5 + $0x4a0] sm:$0xff]
    %v752 = vld [vmem:[%s5 + $0x4a8] sm:$0xff]
    %v753 = vld [vmem:[%s5 + $0x4b0] sm:$0xff]
    %v754 = vld [vmem:[%s5 + $0x4b8] sm:$0xff]
    %v755 = vld [vmem:[%s5 + $0x4c0] sm:$0xff]
    %v756 = vld [vmem:[%s5 + $0x4c8] sm:$0xff]
    %v757 = vld [vmem:[%s5 + $0x4d0] sm:$0xff]
    %v758 = vld [vmem:[%s5 + $0x4d8] sm:$0xff]
    %v759 = vld [vmem:[%s5 + $0x4e0] sm:$0xff]
    %v760 = vld [vmem:[%s5 + $0x4e8] sm:$0xff]
    %v761 = vld [vmem:[%s5 + $0x4f0] sm:$0xff]
    %v762 = vld [vmem:[%s5 + $0x4f8] sm:$0xff]
    %v763 = vld [vmem:[%s5 + $0x500] sm:$0xff]
    %v764 = vld [vmem:[%s5 + $0x508] sm:$0xff]
    %v765 = vld [vmem:[%s5 + $0x510] sm:$0xff]
    %v766 = vld [vmem:[%s5 + $0x518] sm:$0xff]
    %v767 = vld [vmem:[%s5 + $0x520] sm:$0xff]
    %v768 = vld [vmem:[%s5 + $0x528] sm:$0xff]
    %v769 = vld [vmem:[%s5 + $0x530] sm:$0xff]
    %v770 = vld [vmem:[%s5 + $0x538] sm:$0xff]
    %v771 = vld [vmem:[%s5 + $0x540] sm:$0xff]
    %v772 = vld [vmem:[%s5 + $0x548] sm:$0xff]
    %v773 = vld [vmem:[%s5 + $0x550] sm:$0xff]
    %v774 = vld [vmem:[%s5 + $0x558] sm:$0xff]
    %v775 = vld [vmem:[%s5 + $0x560] sm:$0xff]
    %v776 = vld [vmem:[%s5 + $0x568] sm:$0xff]
    %v777 = vld [vmem:[%s5 + $0x570] sm:$0xff]
    %v778 = vld [vmem:[%s5 + $0x578] sm:$0xff]
    %v779 = vld [vmem:[%s5 + $0x580] sm:$0xff]
    %v780 = vld [vmem:[%s5 + $0x588] sm:$0xff]
    %v781 = vld [vmem:[%s5 + $0x590] sm:$0xff]
    %v782 = vld [vmem:[%s5 + $0x598] sm:$0xff]
    %v783 = vld [vmem:[%s5 + $0x5a0] sm:$0xff]
    %v784 = vld [vmem:[%s5 + $0x5a8] sm:$0xff]
    %v785 = vld [vmem:[%s5 + $0x5b0] sm:$0xff]
    %v786 = vld [vmem:[%s5 + $0x5b8] sm:$0xff]
    %v787 = vld [vmem:[%s5 + $0x5c0] sm:$0xff]
    %v788 = vld [vmem:[%s5 + $0x5c8] sm:$0xff]
    %v789 = vld [vmem:[%s5 + $0x5d0] sm:$0xff]
    %v790 = vld [vmem:[%s5 + $0x5d8] sm:$0xff]
    %v791 = vld [vmem:[%s5 + $0x5e0] sm:$0xff]
    %v792 = vld [vmem:[%s5 + $0x5e8] sm:$0xff]
    %v793 = vld [vmem:[%s5 + $0x5f0] sm:$0xff]
    %v794 = vld [vmem:[%s5 + $0x5f8] sm:$0xff]
    %v795 = vld [vmem:[%s5 + $0x600] sm:$0xff]
    %v796 = vld [vmem:[%s5 + $0x608] sm:$0xff]
    %v797 = vld [vmem:[%s5 + $0x610] sm:$0xff]
    %v798 = vld [vmem:[%s5 + $0x618] sm:$0xff]
    %v799 = vld [vmem:[%s5 + $0x620] sm:$0xff]
    %v800 = vld [vmem:[%s5 + $0x628] sm:$0xff]
    %v801 = vld [vmem:[%s5 + $0x630] sm:$0xff]
    %v802 = vld [vmem:[%s5 + $0x638] sm:$0xff]
    %v803 = vld [vmem:[%s5 + $0x640] sm:$0xff]
    %v804 = vld [vmem:[%s5 + $0x648] sm:$0xff]
    %v805 = vld [vmem:[%s5 + $0x650] sm:$0xff]
    %v806 = vld [vmem:[%s5 + $0x658] sm:$0xff]
    %v807 = vld [vmem:[%s5 + $0x660] sm:$0xff]
    %v808 = vld [vmem:[%s5 + $0x668] sm:$0xff]
    %v809 = vld [vmem:[%s5 + $0x670] sm:$0xff]
    %v810 = vld [vmem:[%s5 + $0x678] sm:$0xff]
    %v811 = vld [vmem:[%s5 + $0x680] sm:$0xff]
    %v812 = vld [vmem:[%s5 + $0x688] sm:$0xff]
    %v813 = vld [vmem:[%s5 + $0x690] sm:$0xff]
    %v814 = vld [vmem:[%s5 + $0x698] sm:$0xff]
    %v815 = vld [vmem:[%s5 + $0x6a0] sm:$0xff]
    %v816 = vld [vmem:[%s5 + $0x6a8] sm:$0xff]
    %v817 = vld [vmem:[%s5 + $0x6b0] sm:$0xff]
    %v818 = vld [vmem:[%s5 + $0x6b8] sm:$0xff]
    %v819 = vld [vmem:[%s5 + $0x6c0] sm:$0xff]
    %v820 = vld [vmem:[%s5 + $0x6c8] sm:$0xff]
    %v821 = vld [vmem:[%s5 + $0x6d0] sm:$0xff]
    %v822 = vld [vmem:[%s5 + $0x6d8] sm:$0xff]
    %v823 = vld [vmem:[%s5 + $0x6e0] sm:$0xff]
    %v824 = vld [vmem:[%s5 + $0x6e8] sm:$0xff]
    %v825 = vld [vmem:[%s5 + $0x6f0] sm:$0xff]
    %v826 = vld [vmem:[%s5 + $0x6f8] sm:$0xff]
    %v827 = vld [vmem:[%s5 + $0x700] sm:$0xff]
    %v828 = vld [vmem:[%s5 + $0x708] sm:$0xff]
    %v829 = vld [vmem:[%s5 + $0x710] sm:$0xff]
    %v830 = vld [vmem:[%s5 + $0x718] sm:$0xff]
    %v831 = vld [vmem:[%s5 + $0x720] sm:$0xff]
    %v832 = vld [vmem:[%s5 + $0x728] sm:$0xff]
    %v833 = vld [vmem:[%s5 + $0x730] sm:$0xff]
    %v834 = vld [vmem:[%s5 + $0x738] sm:$0xff]
    %v835 = vld [vmem:[%s5 + $0x740] sm:$0xff]
    %v836 = vld [vmem:[%s5 + $0x748] sm:$0xff]
    %v837 = vld [vmem:[%s5 + $0x750] sm:$0xff]
    %v838 = vld [vmem:[%s5 + $0x758] sm:$0xff]
    %v839 = vld [vmem:[%s5 + $0x760] sm:$0xff]
    %v840 = vld [vmem:[%s5 + $0x768] sm:$0xff]
    %v841 = vld [vmem:[%s5 + $0x770] sm:$0xff]
    %v842 = vld [vmem:[%s5 + $0x778] sm:$0xff]
    %v843 = vld [vmem:[%s5 + $0x780] sm:$0xff]
    %v844 = vld [vmem:[%s5 + $0x788] sm:$0xff]
    %v845 = vld [vmem:[%s5 + $0x790] sm:$0xff]
    %v846 = vld [vmem:[%s5 + $0x798] sm:$0xff]
    %v847 = vld [vmem:[%s5 + $0x7a0] sm:$0xff]
    %v848 = vld [vmem:[%s5 + $0x7a8] sm:$0xff]
    %v849 = vld [vmem:[%s5 + $0x7b0] sm:$0xff]
    %v850 = vld [vmem:[%s5 + $0x7b8] sm:$0xff]
    %v851 = vld [vmem:[%s5 + $0x7c0] sm:$0xff]
    %v852 = vld [vmem:[%s5 + $0x7c8] sm:$0xff]
    %v853 = vld [vmem:[%s5 + $0x7d0] sm:$0xff]
    %v854 = vld [vmem:[%s5 + $0x7d8] sm:$0xff]
    %v855 = vld [vmem:[%s5 + $0x7e0] sm:$0xff]
    %v856 = vld [vmem:[%s5 + $0x7e8] sm:$0xff]
    %v857 = vld [vmem:[%s5 + $0x7f0] sm:$0xff]
    %v858 = vld [vmem:[%s5 + $0x7f8] sm:$0xff]
    %v859 = vld [vmem:[%s6] sm:$0x3]
    %v861 = vlaneseq
    %v862 = vshrl.u32 %v861, 7
    %v863 = vsub.s32 0, %v862
    %v864 = vrot.slane %v859, %v863
    %v865 = vlaneseq
    %v866 = vshrl.u32 %v865, 7
    %v867 = vsub.s32 1, %v866
    %v868 = vrot.slane %v859, %v867
    %871 = vmatprep.subr.mxu0 %v604
    %872 = vmatpush1.msra.mxu0 %v603
    %873 = vmatprep.subr.mxu0 %v606
    %874 = vmatpush1.msra.mxu0 %v605
    %875 = vmatprep.subr.mxu0 %v608
    %876 = vmatpush1.msra.mxu0 %v607
    %877 = vmatprep.subr.mxu0 %v610
    %878 = vmatpush1.msra.mxu0 %v609
    %879 = vmatprep.subr.mxu0 %v612
    %880 = vmatpush1.msra.mxu0 %v611
    %881 = vmatprep.subr.mxu0 %v614
    %882 = vmatpush1.msra.mxu0 %v613
    %883 = vmatprep.subr.mxu0 %v616
    %884 = vmatpush1.msra.mxu0 %v615
    %885 = vmatprep.subr.mxu0 %v618
    %886 = vmatpush1.msra.mxu0 %v617
    %887 = vmatprep.subr.mxu0 %v620
    %888 = vmatpush1.msra.mxu0 %v619
    %889 = vmatprep.subr.mxu0 %v622
    %890 = vmatpush1.msra.mxu0 %v621
    %891 = vmatprep.subr.mxu0 %v624
    %892 = vmatpush1.msra.mxu0 %v623
    %893 = vmatprep.subr.mxu0 %v626
    %894 = vmatpush1.msra.mxu0 %v625
    %895 = vmatprep.subr.mxu0 %v628
    %896 = vmatpush1.msra.mxu0 %v627
    %897 = vmatprep.subr.mxu0 %v630
    %898 = vmatpush1.msra.mxu0 %v629
    %899 = vmatprep.subr.mxu0 %v632
    %900 = vmatpush1.msra.mxu0 %v631
    %901 = vmatprep.subr.mxu0 %v634
    %902 = vmatpush1.msra.mxu0 %v633
    %903 = vmatprep.subr.mxu0 %v636
    %904 = vmatpush1.msra.mxu0 %v635
    %905 = vmatprep.subr.mxu0 %v638
    %906 = vmatpush1.msra.mxu0 %v637
    %907 = vmatprep.subr.mxu0 %v640
    %908 = vmatpush1.msra.mxu0 %v639
    %909 = vmatprep.subr.mxu0 %v642
    %910 = vmatpush1.msra.mxu0 %v641
    %911 = vmatprep.subr.mxu0 %v644
    %912 = vmatpush1.msra.mxu0 %v643
    %913 = vmatprep.subr.mxu0 %v646
    %914 = vmatpush1.msra.mxu0 %v645
    %915 = vmatprep.subr.mxu0 %v648
    %916 = vmatpush1.msra.mxu0 %v647
    %917 = vmatprep.subr.mxu0 %v650
    %918 = vmatpush1.msra.mxu0 %v649
    %919 = vmatprep.subr.mxu0 %v652
    %920 = vmatpush1.msra.mxu0 %v651
    %921 = vmatprep.subr.mxu0 %v654
    %922 = vmatpush1.msra.mxu0 %v653
    %923 = vmatprep.subr.mxu0 %v656
    %924 = vmatpush1.msra.mxu0 %v655
    %925 = vmatprep.subr.mxu0 %v658
    %926 = vmatpush1.msra.mxu0 %v657
    %927 = vmatprep.subr.mxu0 %v660
    %928 = vmatpush1.msra.mxu0 %v659
    %929 = vmatprep.subr.mxu0 %v662
    %930 = vmatpush1.msra.mxu0 %v661
    %931 = vmatprep.subr.mxu0 %v664
    %932 = vmatpush1.msra.mxu0 %v663
    %933 = vmatprep.subr.mxu0 %v666
    %934 = vmatpush1.msra.mxu0 %v665
    %935 = vmatprep.mubr.f32.mxu0 %v596
    %936 = vmatmul.mubr.f32.gmra.mrb[0].mxu0 %v595
    %v937 = vpop.f32.mrb[0].mxu0
    %v938 = vadd.f32 %v864, %v937
    %v939 = vpop.f32.mrb[0].mxu0
    %v940 = vadd.f32 %v868, %v939
    %941 = vdwg.mxu0
    %942 = vmatprep.subr.mxu0 %v668
    %943 = vmatpush1.msra.mxu0 %v667
    %944 = vmatprep.subr.mxu0 %v670
    %945 = vmatpush1.msra.mxu0 %v669
    %946 = vmatprep.subr.mxu0 %v672
    %947 = vmatpush1.msra.mxu0 %v671
    %948 = vmatprep.subr.mxu0 %v674
    %949 = vmatpush1.msra.mxu0 %v673
    %950 = vmatprep.subr.mxu0 %v676
    %951 = vmatpush1.msra.mxu0 %v675
    %952 = vmatprep.subr.mxu0 %v678
    %953 = vmatpush1.msra.mxu0 %v677
    %954 = vmatprep.subr.mxu0 %v680
    %955 = vmatpush1.msra.mxu0 %v679
    %956 = vmatprep.subr.mxu0 %v682
    %957 = vmatpush1.msra.mxu0 %v681
    %958 = vmatprep.subr.mxu0 %v684
    %959 = vmatpush1.msra.mxu0 %v683
    %960 = vmatprep.subr.mxu0 %v686
    %961 = vmatpush1.msra.mxu0 %v685
    %962 = vmatprep.subr.mxu0 %v688
    %963 = vmatpush1.msra.mxu0 %v687
    %964 = vmatprep.subr.mxu0 %v690
    %965 = vmatpush1.msra.mxu0 %v689
    %966 = vmatprep.subr.mxu0 %v692
    %967 = vmatpush1.msra.mxu0 %v691
    %968 = vmatprep.subr.mxu0 %v694
    %969 = vmatpush1.msra.mxu0 %v693
    %970 = vmatprep.subr.mxu0 %v696
    %971 = vmatpush1.msra.mxu0 %v695
    %972 = vmatprep.subr.mxu0 %v698
    %973 = vmatpush1.msra.mxu0 %v697
    %974 = vmatprep.subr.mxu0 %v700
    %975 = vmatpush1.msra.mxu0 %v699
    %976 = vmatprep.subr.mxu0 %v702
    %977 = vmatpush1.msra.mxu0 %v701
    %978 = vmatprep.subr.mxu0 %v704
    %979 = vmatpush1.msra.mxu0 %v703
    %980 = vmatprep.subr.mxu0 %v706
    %981 = vmatpush1.msra.mxu0 %v705
    %982 = vmatprep.subr.mxu0 %v708
    %983 = vmatpush1.msra.mxu0 %v707
    %984 = vmatprep.subr.mxu0 %v710
    %985 = vmatpush1.msra.mxu0 %v709
    %986 = vmatprep.subr.mxu0 %v712
    %987 = vmatpush1.msra.mxu0 %v711
    %988 = vmatprep.subr.mxu0 %v714
    %989 = vmatpush1.msra.mxu0 %v713
    %990 = vmatprep.subr.mxu0 %v716
    %991 = vmatpush1.msra.mxu0 %v715
    %992 = vmatprep.subr.mxu0 %v718
    %993 = vmatpush1.msra.mxu0 %v717
    %994 = vmatprep.subr.mxu0 %v720
    %995 = vmatpush1.msra.mxu0 %v719
    %996 = vmatprep.subr.mxu0 %v722
    %997 = vmatpush1.msra.mxu0 %v721
    %998 = vmatprep.subr.mxu0 %v724
    %999 = vmatpush1.msra.mxu0 %v723
    %1000 = vmatprep.subr.mxu0 %v726
    %1001 = vmatpush1.msra.mxu0 %v725
    %1002 = vmatprep.subr.mxu0 %v728
    %1003 = vmatpush1.msra.mxu0 %v727
    %1004 = vmatprep.subr.mxu0 %v730
    %1005 = vmatpush1.msra.mxu0 %v729
    %1006 = vmatprep.mubr.f32.mxu0 %v598
    %1007 = vmatmul.mubr.f32.gmra.mrb[0].mxu0 %v597
    %v1008 = vpop.f32.mrb[0].mxu0
    %v1009 = vadd.f32 %v938, %v1008
    %v1010 = vpop.f32.mrb[0].mxu0
    %v1011 = vadd.f32 %v940, %v1010
    %1012 = vdwg.mxu0
    %1013 = vmatprep.subr.mxu0 %v732
    %1014 = vmatpush1.msra.mxu0 %v731
    %1015 = vmatprep.subr.mxu0 %v734
    %1016 = vmatpush1.msra.mxu0 %v733
    %1017 = vmatprep.subr.mxu0 %v736
    %1018 = vmatpush1.msra.mxu0 %v735
    %1019 = vmatprep.subr.mxu0 %v738
    %1020 = vmatpush1.msra.mxu0 %v737
    %1021 = vmatprep.subr.mxu0 %v740
    %1022 = vmatpush1.msra.mxu0 %v739
    %1023 = vmatprep.subr.mxu0 %v742
    %1024 = vmatpush1.msra.mxu0 %v741
    %1025 = vmatprep.subr.mxu0 %v744
    %1026 = vmatpush1.msra.mxu0 %v743
    %1027 = vmatprep.subr.mxu0 %v746
    %1028 = vmatpush1.msra.mxu0 %v745
    %1029 = vmatprep.subr.mxu0 %v748
    %1030 = vmatpush1.msra.mxu0 %v747
    %1031 = vmatprep.subr.mxu0 %v750
    %1032 = vmatpush1.msra.mxu0 %v749
    %1033 = vmatprep.subr.mxu0 %v752
    %1034 = vmatpush1.msra.mxu0 %v751
    %1035 = vmatprep.subr.mxu0 %v754
    %1036 = vmatpush1.msra.mxu0 %v753
    %1037 = vmatprep.subr.mxu0 %v756
    %1038 = vmatpush1.msra.mxu0 %v755
    %1039 = vmatprep.subr.mxu0 %v758
    %1040 = vmatpush1.msra.mxu0 %v757
    %1041 = vmatprep.subr.mxu0 %v760
    %1042 = vmatpush1.msra.mxu0 %v759
    %1043 = vmatprep.subr.mxu0 %v762
    %1044 = vmatpush1.msra.mxu0 %v761
    %1045 = vmatprep.subr.mxu0 %v764
    %1046 = vmatpush1.msra.mxu0 %v763
    %1047 = vmatprep.subr.mxu0 %v766
    %1048 = vmatpush1.msra.mxu0 %v765
    %1049 = vmatprep.subr.mxu0 %v768
    %1050 = vmatpush1.msra.mxu0 %v767
    %1051 = vmatprep.subr.mxu0 %v770
    %1052 = vmatpush1.msra.mxu0 %v769
    %1053 = vmatprep.subr.mxu0 %v772
    %1054 = vmatpush1.msra.mxu0 %v771
    %1055 = vmatprep.subr.mxu0 %v774
    %1056 = vmatpush1.msra.mxu0 %v773
    %1057 = vmatprep.subr.mxu0 %v776
    %1058 = vmatpush1.msra.mxu0 %v775
    %1059 = vmatprep.subr.mxu0 %v778
    %1060 = vmatpush1.msra.mxu0 %v777
    %1061 = vmatprep.subr.mxu0 %v780
    %1062 = vmatpush1.msra.mxu0 %v779
    %1063 = vmatprep.subr.mxu0 %v782
    %1064 = vmatpush1.msra.mxu0 %v781
    %1065 = vmatprep.subr.mxu0 %v784
    %1066 = vmatpush1.msra.mxu0 %v783
    %1067 = vmatprep.subr.mxu0 %v786
    %1068 = vmatpush1.msra.mxu0 %v785
    %1069 = vmatprep.subr.mxu0 %v788
    %1070 = vmatpush1.msra.mxu0 %v787
    %1071 = vmatprep.subr.mxu0 %v790
    %1072 = vmatpush1.msra.mxu0 %v789
    %1073 = vmatprep.subr.mxu0 %v792
    %1074 = vmatpush1.msra.mxu0 %v791
    %1075 = vmatprep.subr.mxu0 %v794
    %1076 = vmatpush1.msra.mxu0 %v793
    %1077 = vmatprep.mubr.f32.mxu0 %v600
    %1078 = vmatmul.mubr.f32.gmra.mrb[0].mxu0 %v599
    %v1079 = vpop.f32.mrb[0].mxu0
    %v1080 = vadd.f32 %v1009, %v1079
    %v1081 = vpop.f32.mrb[0].mxu0
    %v1082 = vadd.f32 %v1011, %v1081
    %1083 = vdwg.mxu0
    %1084 = vmatprep.subr.mxu0 %v796
    %1085 = vmatpush1.msra.mxu0 %v795
    %1086 = vmatprep.subr.mxu0 %v798
    %1087 = vmatpush1.msra.mxu0 %v797
    %1088 = vmatprep.subr.mxu0 %v800
    %1089 = vmatpush1.msra.mxu0 %v799
    %1090 = vmatprep.subr.mxu0 %v802
    %1091 = vmatpush1.msra.mxu0 %v801
    %1092 = vmatprep.subr.mxu0 %v804
    %1093 = vmatpush1.msra.mxu0 %v803
    %1094 = vmatprep.subr.mxu0 %v806
    %1095 = vmatpush1.msra.mxu0 %v805
    %1096 = vmatprep.subr.mxu0 %v808
    %1097 = vmatpush1.msra.mxu0 %v807
    %1098 = vmatprep.subr.mxu0 %v810
    %1099 = vmatpush1.msra.mxu0 %v809
    %1100 = vmatprep.subr.mxu0 %v812
    %1101 = vmatpush1.msra.mxu0 %v811
    %1102 = vmatprep.subr.mxu0 %v814
    %1103 = vmatpush1.msra.mxu0 %v813
    %1104 = vmatprep.subr.mxu0 %v816
    %1105 = vmatpush1.msra.mxu0 %v815
    %1106 = vmatprep.subr.mxu0 %v818
    %1107 = vmatpush1.msra.mxu0 %v817
    %1108 = vmatprep.subr.mxu0 %v820
    %1109 = vmatpush1.msra.mxu0 %v819
    %1110 = vmatprep.subr.mxu0 %v822
    %1111 = vmatpush1.msra.mxu0 %v821
    %1112 = vmatprep.subr.mxu0 %v824
    %1113 = vmatpush1.msra.mxu0 %v823
    %1114 = vmatprep.subr.mxu0 %v826
    %1115 = vmatpush1.msra.mxu0 %v825
    %1116 = vmatprep.subr.mxu0 %v828
    %1117 = vmatpush1.msra.mxu0 %v827
    %1118 = vmatprep.subr.mxu0 %v830
    %1119 = vmatpush1.msra.mxu0 %v829
    %1120 = vmatprep.subr.mxu0 %v832
    %1121 = vmatpush1.msra.mxu0 %v831
    %1122 = vmatprep.subr.mxu0 %v834
    %1123 = vmatpush1.msra.mxu0 %v833
    %1124 = vmatprep.subr.mxu0 %v836
    %1125 = vmatpush1.msra.mxu0 %v835
    %1126 = vmatprep.subr.mxu0 %v838
    %1127 = vmatpush1.msra.mxu0 %v837
    %1128 = vmatprep.subr.mxu0 %v840
    %1129 = vmatpush1.msra.mxu0 %v839
    %1130 = vmatprep.subr.mxu0 %v842
    %1131 = vmatpush1.msra.mxu0 %v841
    %1132 = vmatprep.subr.mxu0 %v844
    %1133 = vmatpush1.msra.mxu0 %v843
    %1134 = vmatprep.subr.mxu0 %v846
    %1135 = vmatpush1.msra.mxu0 %v845
    %1136 = vmatprep.subr.mxu0 %v848
    %1137 = vmatpush1.msra.mxu0 %v847
    %1138 = vmatprep.subr.mxu0 %v850
    %1139 = vmatpush1.msra.mxu0 %v849
    %1140 = vmatprep.subr.mxu0 %v852
    %1141 = vmatpush1.msra.mxu0 %v851
    %1142 = vmatprep.subr.mxu0 %v854
    %1143 = vmatpush1.msra.mxu0 %v853
    %1144 = vmatprep.subr.mxu0 %v856
    %1145 = vmatpush1.msra.mxu0 %v855
    %1146 = vmatprep.subr.mxu0 %v858
    %1147 = vmatpush1.msra.mxu0 %v857
    %1148 = vmatprep.mubr.f32.mxu0 %v602
    %1149 = vmatmul.mubr.f32.gmra.mrb[0].mxu0 %v601
    %v1150 = vpop.f32.mrb[0].mxu0
    %v1151 = vadd.f32 %v1080, %v1150
    %v1152 = vpop.f32.mrb[0].mxu0
    %v1153 = vadd.f32 %v1082, %v1152
    %1154 = vdwg.mxu0
    %v1155 = vmax.f32 %v1151, 0.0
    %v1156 = vmax.f32 %v1153, 0.0
    %v1157 = vld [vmem:[%s7] sm:$0x3]
    %v1159 = vlaneseq
    %v1160 = vshrl.u32 %v1159, 7
    %v1161 = vsub.s32 0, %v1160
    %v1162 = vrot.slane %v1157, %v1161
    %v1163 = vlaneseq
    %v1164 = vshrl.u32 %v1163, 7
    %v1165 = vsub.s32 1, %v1164
    %v1166 = vrot.slane %v1157, %v1165
    %v1169 = vmul.f32 %v1155, %v1162
    %v1170 = vmul.f32 %v1156, %v1166
    %v1171 = vadd.f32 %v1169, %v1170
    %1172 = vadd.xlane.f32.xlu0 %v1171
    %v1173 = vpop.xlane.xlu0 %1172
    %v1174 = vld [vmem:[#allocation3] sm:$0x1]
    %v1176 = vlaneseq
    %v1177 = vshrl.u32 %v1176, 7
    %v1178 = vsub.s32 0, %v1177
    %v1179 = vrot.slane %v1174, %v1178
    %v1181 = vadd.f32 %v1173, %v1179
    %vm1182 = vcmask 7168
    %1183 = vst.msk [vmem:[%s9] sm:$0xff] %vm1182, %v1181
  $region45: #{ugp_v1_forward.1} parent=0 // pred_fallthru
    _
  // Predicated region
  $region46: #{ugp_v1_forward.1} parent=0 // pred_check
    _
  $region47: #{ugp_v1_forward.1} parent=0 // pred_check_branch
    %1185 = sbr.rel (0) target = $region49
  $region48: #{ugp_v1_forward.1} parent=0 // pred_region
    _
  $region49: #{ugp_v1_forward.1} parent=0 // pred_fallthru
    _
  // Predicated region
  $region50: #{ugp_v1_forward.1} parent=0 // pred_check
    _
  $region51: #{ugp_v1_forward.1} parent=0 // pred_check_branch
    %1187 = sbr.rel (0) target = $region53
  $region52: #{ugp_v1_forward.1} parent=0 // pred_region
    _
  $region53: #{ugp_v1_forward.1} parent=0 // pred_fallthru
    _

</llo_original>
